<compile_context>
chip_gen: v7x
topology: tpu7x:2x2x1
jax: 0.10.0
libtpu: 0.0.40
codegen_flags: <defaults>
</compile_context>

<pallas_src>
import functools

import jax
import jax.numpy as jnp
from jax import lax
from jax.experimental import pallas as pl
from jax.experimental.pallas import tpu as pltpu


def _round_up(x, m):
    return ((x + m - 1) // m) * m


# ----------------------------------------------------------------------------
# Kernel: one (batch-block, layer) grid step runs a full LSTM layer over T.
# ----------------------------------------------------------------------------
def lstm_layer_kernel(x_ref, wih_ref, whh_ref, b_ref,
                      out_ref, hn_ref, cn_ref,
                      gates_ref):
    """Shapes (per grid step):
      x_ref     : (T, BB, E)    time-major embedded input (layer 0 only)
      wih_ref   : (1, Dr, 4H)   this layer's input->hidden weights (row-padded)
      whh_ref   : (1, H, 4H)    this layer's hidden->hidden weights
      b_ref     : (1, 1, 4H)    combined bias b_ih + b_hh
      out_ref   : (T, BB, H)    layer outputs; constant index map over the
                                layer axis -> also the VMEM-resident
                                inter-layer activation buffer.  NOTE: this is
                                only safe because HBM writeback happens when
                                the batch-block index changes / at grid end.
      hn_ref    : (1, BB, H)    final hidden state of this layer
      cn_ref    : (1, BB, H)    final cell state of this layer
      gates_ref : (Tc, BB, 4H)  VMEM scratch for one T-chunk of input gates
    """
    layer = pl.program_id(1)

    T, BB, E = x_ref.shape
    _, H, GW = whh_ref.shape          # GW == 4*H, contiguous gates
    Tc = gates_ref.shape[0]
    n_chunks = T // Tc

    whh = whh_ref[0]                   # (H, 4H) — stays in vregs/VMEM all layer
    bias = b_ref[0]                    # (1, 4H)

    # Hoisted lane mask: lanes [2H, 3H) are the tanh cell gate, rest sigmoid.
    lane = lax.broadcasted_iota(jnp.int32, (BB, GW), 1)
    is_g = jnp.logical_and(lane >= 2 * H, lane < 3 * H)

    h = jnp.zeros((BB, H), jnp.float32)
    c = jnp.zeros((BB, H), jnp.float32)

    for ci in range(n_chunks):         # static chunk loop bounds gates scratch
        t0 = ci * Tc

        # ---- hoisted input projection for this chunk: one MXU GEMM --------
        @pl.when(layer == 0)
        def _(t0=t0):
            xin = x_ref[t0:t0 + Tc].reshape(Tc * BB, E)
            g = jnp.dot(xin, wih_ref[0, :E, :],
                        preferred_element_type=jnp.float32) + bias
            gates_ref[...] = g.reshape(Tc, BB, GW)

        @pl.when(layer > 0)
        def _(t0=t0):
            # Reads previous layer's outputs (still resident in out_ref).
            hin = out_ref[t0:t0 + Tc].reshape(Tc * BB, H)
            g = jnp.dot(hin, wih_ref[0, :H, :],
                        preferred_element_type=jnp.float32) + bias
            gates_ref[...] = g.reshape(Tc, BB, GW)

        # ---- sequential recurrence over the chunk --------------------------
        def step(t, carry, t0=t0):
            h, c = carry
            # TODO(synk): hold W_hh in MXU staging registers across the time
            # loop (pltpu.matmul_push_rhs / matmul_acc_lhs / matmul_pop) to
            # avoid re-loading the RHS every step; kept as jnp.dot for
            # portability across v5e/v6e/v7x.
            g = gates_ref[t] + jnp.dot(h, whh,
                                       preferred_element_type=jnp.float32)
            # Single tanh over all 4H lanes: sigmoid(x) = 0.5*tanh(x/2) + 0.5.
            scl = jnp.where(is_g, g, 0.5 * g)
            th = jnp.tanh(scl)
            act = jnp.where(is_g, th, 0.5 * th + 0.5)
            i_g = act[:, 0 * H:1 * H]
            f_g = act[:, 1 * H:2 * H]
            g_g = act[:, 2 * H:3 * H]
            o_g = act[:, 3 * H:4 * H]
            c_new = f_g * c + i_g * g_g
            h_new = o_g * jnp.tanh(c_new)
            out_ref[t0 + t] = h_new
            return h_new, c_new

        h, c = lax.fori_loop(0, Tc, step, (h, c), unroll=min(Tc, 8))

    hn_ref[0] = h
    cn_ref[0] = c


def fused_lstm(x_pad, wih, whh, bias, *, batch_block, t_chunk):
    """x_pad: (T, Bp, E); wih: (L, Dr, 4H); whh: (L, H, 4H); bias: (L, 1, 4H)."""
    T, Bp, E = x_pad.shape
    L, Dr, GW = wih.shape
    H = whh.shape[1]
    BB = batch_block
    assert Bp % BB == 0 and T % t_chunk == 0
    NB = Bp // BB

    out_shapes = (
        jax.ShapeDtypeStruct((T, Bp, H), jnp.float32),   # outputs (last layer)
        jax.ShapeDtypeStruct((L, Bp, H), jnp.float32),   # h_n
        jax.ShapeDtypeStruct((L, Bp, H), jnp.float32),   # c_n
    )

    grid_spec = pltpu.PrefetchScalarGridSpec(
        num_scalar_prefetch=0,
        grid=(NB, L),                                    # (batch-block, layer)
        in_specs=[
            pl.BlockSpec((T, BB, E), lambda b, l: (0, b, 0)),
            pl.BlockSpec((1, Dr, GW), lambda b, l: (l, 0, 0)),
            pl.BlockSpec((1, H, GW), lambda b, l: (l, 0, 0)),
            pl.BlockSpec((1, 1, GW), lambda b, l: (l, 0, 0)),
        ],
        out_specs=[
            # Constant index over the layer axis -> stays VMEM-resident and is
            # reused as the inter-layer activation buffer; written back only
            # when the batch-block changes / at grid end.
            pl.BlockSpec((T, BB, H), lambda b, l: (0, b, 0)),
            pl.BlockSpec((1, BB, H), lambda b, l: (l, b, 0)),
            pl.BlockSpec((1, BB, H), lambda b, l: (l, b, 0)),
        ],
        scratch_shapes=[pltpu.VMEM((t_chunk, BB, GW), jnp.float32)],
    )

    # Rough VMEM budget (double-buffered blocks + scratch), with headroom,
    # capped below v7x's 64 MiB physical VMEM.
    est = 4 * (2 * (T * BB * E + Dr * GW + H * GW + GW
                    + T * BB * H + 2 * BB * H)
               + t_chunk * BB * GW)
    vmem_limit = int(min(60 * 2 ** 20, max(4 * est, 8 * 2 ** 20)))

    return pl.pallas_call(
        lstm_layer_kernel,
        out_shape=out_shapes,
        grid_spec=grid_spec,
        compiler_params=pltpu.CompilerParams(
            dimension_semantics=("parallel", "arbitrary"),
            vmem_limit_bytes=vmem_limit),
    )(x_pad, wih, whh, bias)


# ----------------------------------------------------------------------------
# Parameters (PyTorch layout) + packed kernel parameters
# ----------------------------------------------------------------------------
def init_encoder_params(key, vocab_size, embed_dim, hidden_dim, num_layers,
                        pad_idx):
    """Raw parameters mirroring the PyTorch module's shapes."""
    params = {}
    key, ek = jax.random.split(key)
    emb = jax.random.normal(ek, (vocab_size, embed_dim), jnp.float32)
    emb = emb.at[pad_idx].set(0.0)          # padding_idx row is zero
    params["embedding"] = emb

    bound = 1.0 / float(hidden_dim) ** 0.5
    layers = []
    for layer in range(num_layers):
        in_dim = embed_dim if layer == 0 else hidden_dim
        key, k1, k2, k3, k4 = jax.random.split(key, 5)
        layers.append({
            "w_ih": jax.random.uniform(k1, (4 * hidden_dim, in_dim),
                                       jnp.float32, -bound, bound),
            "w_hh": jax.random.uniform(k2, (4 * hidden_dim, hidden_dim),
                                       jnp.float32, -bound, bound),
            "b_ih": jax.random.uniform(k3, (4 * hidden_dim,),
                                       jnp.float32, -bound, bound),
            "b_hh": jax.random.uniform(k4, (4 * hidden_dim,),
                                       jnp.float32, -bound, bound),
        })
    params["layers"] = layers
    return params


def prepare_kernel_params(params):
    """Transpose to (in, 4H), stack layers with a uniform row count.

    No per-gate padding: gates stay contiguous (width 4H).  For real models
    with H, E >= 128, rounding H/E up to multiples of 256 would better fill the
    v6e/v7x 2x256^2 MXU on the hoisted GEMM; at the demo size it only wastes
    VMEM/FLOPs, so it is intentionally not done here.
    """
    emb = params["embedding"]
    E = emb.shape[1]
    H = params["layers"][0]["w_hh"].shape[1]
    Dr = max(E, H)                            # uniform row count for the stack
    GW = 4 * H

    wih_list, whh_list, b_list = [], [], []
    for lp in params["layers"]:
        w_ih_t = lp["w_ih"].T                 # (in_dim, 4H)
        in_dim = w_ih_t.shape[0]
        wih_list.append(jnp.pad(w_ih_t, ((0, Dr - in_dim), (0, 0))))
        whh_list.append(lp["w_hh"].T)         # (H, 4H)
        b_list.append((lp["b_ih"] + lp["b_hh"]).reshape(1, GW))

    return {
        "embedding": emb,
        "wih": jnp.stack(wih_list, axis=0),   # (L, Dr, 4H)
        "whh": jnp.stack(whh_list, axis=0),   # (L, H, 4H)
        "bias": jnp.stack(b_list, axis=0),    # (L, 1, 4H)
    }


# ----------------------------------------------------------------------------
# Forward (matches nn.Embedding + nn.LSTM(batch_first=True))
# ----------------------------------------------------------------------------
@jax.jit
def encoder_forward(kparams, src):
    """src: (B, T) int32 -> (outputs (B,T,H), (h_n (L,B,H), c_n (L,B,H)))."""
    B, T = src.shape
    # Time-major gather directly: (T, B, E), no extra transpose.
    emb_t = jnp.take(kparams["embedding"], src.T, axis=0)

    # Batch padding / block choice: at most two batch blocks so both v7x
    # TensorCores are used when the batch is large enough.
    Bp8 = _round_up(max(B, 1), 8)
    BB = 8 if Bp8 <= 8 else _round_up((Bp8 + 1) // 2, 8)
    NB = -(-Bp8 // BB)
    Bp = NB * BB
    x_pad = jnp.pad(emb_t, ((0, 0), (0, Bp - B), (0, 0)))

    # T-chunking bounds the gates scratch; demo T is tiny so one chunk.
    t_chunk = 64 if (T > 64 and T % 64 == 0) else T

    out_pad, hn_pad, cn_pad = fused_lstm(
        x_pad, kparams["wih"], kparams["whh"], kparams["bias"],
        batch_block=BB, t_chunk=t_chunk)

    outputs = jnp.transpose(out_pad[:, :B, :], (1, 0, 2))   # (B, T, H)
    h_n = hn_pad[:, :B, :]                                    # (L, B, H)
    c_n = cn_pad[:, :B, :]                                    # (L, B, H)
    return outputs, (h_n, c_n)


# ----------------------------------------------------------------------------
# Pure-JAX reference (for validation only)
# ----------------------------------------------------------------------------
def encoder_forward_ref(params, src):
    x = jnp.take(params["embedding"], src, axis=0)            # (B, T, E)
    B = src.shape[0]
    h_fs, c_fs = [], []
    for lp in params["layers"]:
        w_ih_t, w_hh_t = lp["w_ih"].T, lp["w_hh"].T
        b = lp["b_ih"] + lp["b_hh"]
        H = lp["w_hh"].shape[1]

        def step(carry, x_t, w_ih_t=w_ih_t, w_hh_t=w_hh_t, b=b, H=H):
            h, c = carry
            g = (jnp.dot(x_t, w_ih_t, precision=jax.lax.Precision.HIGHEST)
                 + jnp.dot(h, w_hh_t, precision=jax.lax.Precision.HIGHEST) + b)
            i = jax.nn.sigmoid(g[:, 0:H])
            f = jax.nn.sigmoid(g[:, H:2 * H])
            gg = jnp.tanh(g[:, 2 * H:3 * H])
            o = jax.nn.sigmoid(g[:, 3 * H:4 * H])
            c_new = f * c + i * gg
            h_new = o * jnp.tanh(c_new)
            return (h_new, c_new), h_new

        h0 = jnp.zeros((B, H), jnp.float32)
        c0 = jnp.zeros((B, H), jnp.float32)
        (h_f, c_f), ys = lax.scan(step, (h0, c0), jnp.transpose(x, (1, 0, 2)))
        x = jnp.transpose(ys, (1, 0, 2))
        h_fs.append(h_f)
        c_fs.append(c_f)
    return x, (jnp.stack(h_fs), jnp.stack(c_fs))


if __name__ == "__main__":
    VOCAB, EMBED, HIDDEN, LAYERS, PAD = 50, 16, 32, 2, 0
    B, T = 2, 8

    key = jax.random.PRNGKey(0)
    pkey, dkey = jax.random.split(key)
    raw_params = init_encoder_params(pkey, VOCAB, EMBED, HIDDEN, LAYERS, PAD)
    kparams = prepare_kernel_params(raw_params)

    src = jax.random.randint(dkey, (B, T), 0, VOCAB, dtype=jnp.int32)

    outputs, (h_n, c_n) = encoder_forward(kparams, src)
    jax.block_until_ready((outputs, h_n, c_n))

    assert outputs.shape == (B, T, HIDDEN)
    assert h_n.shape == (LAYERS, B, HIDDEN)
    assert c_n.shape == (LAYERS, B, HIDDEN)

    # Numerical check against the plain-JAX reference.
    ref_out, (ref_h, ref_c) = encoder_forward_ref(raw_params, src)
    for got, ref in ((outputs, ref_out), (h_n, ref_h), (c_n, ref_c)):
        err = float(jnp.max(jnp.abs(got - ref)))
        assert jnp.allclose(got, ref, atol=5e-3, rtol=5e-3), f"max err {err}"

    print("KERNEL_OK")
</pallas_src>

<mosaic_0001>
module attributes {stable_mosaic.version = 11 : i64} {
  func.func @lstm_layer_kernel(%arg0: i32, %arg1: i32, %arg2: memref<8x8x16xf32, #tpu.memory_space<vmem>>, %arg3: memref<1x32x128xf32, #tpu.memory_space<vmem>>, %arg4: memref<1x32x128xf32, #tpu.memory_space<vmem>>, %arg5: memref<1x1x128xf32, #tpu.memory_space<vmem>>, %arg6: memref<8x8x32xf32, #tpu.memory_space<vmem>>, %arg7: memref<1x8x32xf32, #tpu.memory_space<vmem>>, %arg8: memref<1x8x32xf32, #tpu.memory_space<vmem>>, %arg9: memref<8x8x128xf32, #tpu.memory_space<vmem>>) attributes {dimension_semantics = [#tpu.dimension_semantics<parallel>, #tpu.dimension_semantics<arbitrary>], iteration_bounds = array<i64: 1, 2>, scalar_prefetch = 0 : i64, scratch_operands = 1 : i64, tpu.core_type = #tpu.core_type<tc>, window_params = [{transform_indices = @transform_0, window_bounds = array<i64: 8, 8, 16>}, {transform_indices = @transform_1, window_bounds = array<i64: 1, 32, 128>}, {transform_indices = @transform_2, window_bounds = array<i64: 1, 32, 128>}, {transform_indices = @transform_3, window_bounds = array<i64: 1, 1, 128>}, {transform_indices = @transform_4, window_bounds = array<i64: 8, 8, 32>}, {transform_indices = @transform_5, window_bounds = array<i64: 1, 8, 32>}, {transform_indices = @transform_6, window_bounds = array<i64: 1, 8, 32>}]} {
    %c0 = arith.constant 0 : index
    %c0_0 = arith.constant 0 : index
    %c0_1 = arith.constant 0 : index
    %0 = vector.load %arg4[%c0, %c0_0, %c0_1] : memref<1x32x128xf32, #tpu.memory_space<vmem>>, vector<1x32x128xf32>
    %1 = vector.shape_cast %0 : vector<1x32x128xf32> to vector<32x128xf32>
    %c0_2 = arith.constant 0 : index
    %c0_3 = arith.constant 0 : index
    %c0_4 = arith.constant 0 : index
    %2 = vector.load %arg5[%c0_2, %c0_3, %c0_4] : memref<1x1x128xf32, #tpu.memory_space<vmem>>, vector<1x1x128xf32>
    %3 = vector.shape_cast %2 : vector<1x1x128xf32> to vector<1x128xf32>
    %4 = tpu.iota {dimensions = array<i32: 1>} : vector<8x128xi32>
    %c64_i32 = arith.constant 64 : i32
    %5 = vector.broadcast %c64_i32 : i32 to vector<8x128xi32>
    %6 = arith.cmpi sge, %4, %5 : vector<8x128xi32>
    %c96_i32 = arith.constant 96 : i32
    %7 = vector.broadcast %c96_i32 : i32 to vector<8x128xi32>
    %8 = arith.cmpi slt, %4, %7 : vector<8x128xi32>
    %9 = arith.andi %6, %8 : vector<8x128xi1>
    %cst = arith.constant 0.000000e+00 : f32
    %10 = vector.broadcast %cst : f32 to vector<8x32xf32>
    %cst_5 = arith.constant 0.000000e+00 : f32
    %11 = vector.broadcast %cst_5 : f32 to vector<8x32xf32>
    %c0_i32 = arith.constant 0 : i32
    %12 = arith.cmpi eq, %arg1, %c0_i32 : i32
    %13 = arith.extui %12 : i1 to i32
    %c0_i32_6 = arith.constant 0 : i32
    %14 = arith.cmpi ne, %13, %c0_i32_6 : i32
    scf.if %14 {
      %c0_88 = arith.constant 0 : index
      %c0_89 = arith.constant 0 : index
      %c0_90 = arith.constant 0 : index
      %248 = vector.load %arg2[%c0_88, %c0_89, %c0_90] : memref<8x8x16xf32, #tpu.memory_space<vmem>>, vector<8x8x16xf32>
      %249 = vector.shape_cast %248 : vector<8x8x16xf32> to vector<64x16xf32>
      %c0_91 = arith.constant 0 : index
      %c0_92 = arith.constant 0 : index
      %c0_93 = arith.constant 0 : index
      %250 = vector.load %arg3[%c0_91, %c0_92, %c0_93] : memref<1x32x128xf32, #tpu.memory_space<vmem>>, vector<1x16x128xf32>
      %251 = vector.shape_cast %250 : vector<1x16x128xf32> to vector<16x128xf32>
      %cst_94 = arith.constant dense<0.000000e+00> : vector<64x128xf32>
      %252 = tpu.matmul %249, %251, %cst_94 {dimension_numbers = #tpu.dot_dimension_numbers<[1], [0], [0], [1], [0, 0, 1, 1], [], []>} : vector<64x16xf32>, vector<16x128xf32>, vector<64x128xf32> -> vector<64x128xf32>
      %253 = vector.broadcast %3 : vector<1x128xf32> to vector<64x128xf32>
      %254 = arith.addf %252, %253 : vector<64x128xf32>
      %255 = vector.shape_cast %254 : vector<64x128xf32> to vector<8x8x128xf32>
      %c0_95 = arith.constant 0 : index
      %c0_96 = arith.constant 0 : index
      %c0_97 = arith.constant 0 : index
      %256 = vector.load %arg9[%c0_95, %c0_96, %c0_97] : memref<8x8x128xf32, #tpu.memory_space<vmem>>, vector<8x8x128xf32>
      tpu.vector_store %arg9[%c0_95, %c0_96, %c0_97], %255 {strides = array<i32>} : memref<8x8x128xf32, #tpu.memory_space<vmem>>, vector<8x8x128xf32>,
    } else {
    }
    %c0_i32_7 = arith.constant 0 : i32
    %15 = arith.cmpi sgt, %arg1, %c0_i32_7 : i32
    %16 = arith.extui %15 : i1 to i32
    %c0_i32_8 = arith.constant 0 : i32
    %17 = arith.cmpi ne, %16, %c0_i32_8 : i32
    scf.if %17 {
      %c0_88 = arith.constant 0 : index
      %c0_89 = arith.constant 0 : index
      %c0_90 = arith.constant 0 : index
      %248 = vector.load %arg6[%c0_88, %c0_89, %c0_90] : memref<8x8x32xf32, #tpu.memory_space<vmem>>, vector<8x8x32xf32>
      %249 = vector.shape_cast %248 : vector<8x8x32xf32> to vector<64x32xf32>
      %c0_91 = arith.constant 0 : index
      %c0_92 = arith.constant 0 : index
      %c0_93 = arith.constant 0 : index
      %250 = vector.load %arg3[%c0_91, %c0_92, %c0_93] : memref<1x32x128xf32, #tpu.memory_space<vmem>>, vector<1x32x128xf32>
      %251 = vector.shape_cast %250 : vector<1x32x128xf32> to vector<32x128xf32>
      %cst_94 = arith.constant dense<0.000000e+00> : vector<64x128xf32>
      %252 = tpu.matmul %249, %251, %cst_94 {dimension_numbers = #tpu.dot_dimension_numbers<[1], [0], [0], [1], [0, 0, 1, 1], [], []>} : vector<64x32xf32>, vector<32x128xf32>, vector<64x128xf32> -> vector<64x128xf32>
      %253 = vector.broadcast %3 : vector<1x128xf32> to vector<64x128xf32>
      %254 = arith.addf %252, %253 : vector<64x128xf32>
      %255 = vector.shape_cast %254 : vector<64x128xf32> to vector<8x8x128xf32>
      %c0_95 = arith.constant 0 : index
      %c0_96 = arith.constant 0 : index
      %c0_97 = arith.constant 0 : index
      %256 = vector.load %arg9[%c0_95, %c0_96, %c0_97] : memref<8x8x128xf32, #tpu.memory_space<vmem>>, vector<8x8x128xf32>
      tpu.vector_store %arg9[%c0_95, %c0_96, %c0_97], %255 {strides = array<i32>} : memref<8x8x128xf32, #tpu.memory_space<vmem>>, vector<8x8x128xf32>,
    } else {
    }
    %c0_i32_9 = arith.constant 0 : i32
    %18 = arith.index_cast %c0_i32_9 : i32 to index
    %c0_10 = arith.constant 0 : index
    %c0_11 = arith.constant 0 : index
    %19 = vector.load %arg9[%18, %c0_10, %c0_11] : memref<8x8x128xf32, #tpu.memory_space<vmem>>, vector<1x8x128xf32>
    %20 = vector.shape_cast %19 : vector<1x8x128xf32> to vector<8x128xf32>
    %cst_12 = arith.constant dense<0.000000e+00> : vector<8x128xf32>
    %21 = tpu.matmul %10, %1, %cst_12 {dimension_numbers = #tpu.dot_dimension_numbers<[1], [0], [0], [1], [0, 0, 1, 1], [], []>} : vector<8x32xf32>, vector<32x128xf32>, vector<8x128xf32> -> vector<8x128xf32>
    %22 = arith.addf %20, %21 : vector<8x128xf32>
    %cst_13 = arith.constant 5.000000e-01 : f32
    %23 = vector.broadcast %cst_13 : f32 to vector<8x128xf32>
    %24 = arith.mulf %23, %22 : vector<8x128xf32>
    %25 = arith.select %9, %22, %24 : vector<8x128xi1>, vector<8x128xf32>
    %26 = math.tanh %25 : vector<8x128xf32>
    %cst_14 = arith.constant 5.000000e-01 : f32
    %27 = vector.broadcast %cst_14 : f32 to vector<8x128xf32>
    %28 = arith.mulf %27, %26 : vector<8x128xf32>
    %cst_15 = arith.constant 5.000000e-01 : f32
    %29 = vector.broadcast %cst_15 : f32 to vector<8x128xf32>
    %30 = arith.addf %28, %29 : vector<8x128xf32>
    %31 = arith.select %9, %26, %30 : vector<8x128xi1>, vector<8x128xf32>
    %32 = vector.extract_strided_slice %31 {offsets = [0, 0], sizes = [8, 32], strides = [1, 1]} : vector<8x128xf32> to vector<8x32xf32>
    %33 = vector.extract_strided_slice %31 {offsets = [0, 32], sizes = [8, 32], strides = [1, 1]} : vector<8x128xf32> to vector<8x32xf32>
    %34 = vector.extract_strided_slice %31 {offsets = [0, 64], sizes = [8, 32], strides = [1, 1]} : vector<8x128xf32> to vector<8x32xf32>
    %35 = vector.extract_strided_slice %31 {offsets = [0, 96], sizes = [8, 32], strides = [1, 1]} : vector<8x128xf32> to vector<8x32xf32>
    %36 = arith.mulf %33, %11 : vector<8x32xf32>
    %37 = arith.mulf %32, %34 : vector<8x32xf32>
    %38 = arith.addf %36, %37 : vector<8x32xf32>
    %39 = math.tanh %38 : vector<8x32xf32>
    %40 = arith.mulf %35, %39 : vector<8x32xf32>
    %c0_i32_16 = arith.constant 0 : i32
    %41 = arith.addi %c0_i32_16, %c0_i32_9 : i32
    %42 = arith.index_cast %41 : i32 to index
    %c0_17 = arith.constant 0 : index
    %c0_18 = arith.constant 0 : index
    %43 = vector.load %arg6[%42, %c0_17, %c0_18] : memref<8x8x32xf32, #tpu.memory_space<vmem>>, vector<1x8x32xf32>
    %44 = vector.shape_cast %43 : vector<1x8x32xf32> to vector<8x32xf32>
    %45 = vector.shape_cast %40 : vector<8x32xf32> to vector<1x8x32xf32>
    tpu.vector_store %arg6[%42, %c0_17, %c0_18], %45 {strides = array<i32>} : memref<8x8x32xf32, #tpu.memory_space<vmem>>, vector<1x8x32xf32>,
    %c1_i32 = arith.constant 1 : i32
    %46 = arith.index_cast %c1_i32 : i32 to index
    %c0_19 = arith.constant 0 : index
    %c0_20 = arith.constant 0 : index
    %47 = vector.load %arg9[%46, %c0_19, %c0_20] : memref<8x8x128xf32, #tpu.memory_space<vmem>>, vector<1x8x128xf32>
    %48 = vector.shape_cast %47 : vector<1x8x128xf32> to vector<8x128xf32>
    %cst_21 = arith.constant dense<0.000000e+00> : vector<8x128xf32>
    %49 = tpu.matmul %40, %1, %cst_21 {dimension_numbers = #tpu.dot_dimension_numbers<[1], [0], [0], [1], [0, 0, 1, 1], [], []>} : vector<8x32xf32>, vector<32x128xf32>, vector<8x128xf32> -> vector<8x128xf32>
    %50 = arith.addf %48, %49 : vector<8x128xf32>
    %cst_22 = arith.constant 5.000000e-01 : f32
    %51 = vector.broadcast %cst_22 : f32 to vector<8x128xf32>
    %52 = arith.mulf %51, %50 : vector<8x128xf32>
    %53 = arith.select %9, %50, %52 : vector<8x128xi1>, vector<8x128xf32>
    %54 = math.tanh %53 : vector<8x128xf32>
    %cst_23 = arith.constant 5.000000e-01 : f32
    %55 = vector.broadcast %cst_23 : f32 to vector<8x128xf32>
    %56 = arith.mulf %55, %54 : vector<8x128xf32>
    %cst_24 = arith.constant 5.000000e-01 : f32
    %57 = vector.broadcast %cst_24 : f32 to vector<8x128xf32>
    %58 = arith.addf %56, %57 : vector<8x128xf32>
    %59 = arith.select %9, %54, %58 : vector<8x128xi1>, vector<8x128xf32>
    %60 = vector.extract_strided_slice %59 {offsets = [0, 0], sizes = [8, 32], strides = [1, 1]} : vector<8x128xf32> to vector<8x32xf32>
    %61 = vector.extract_strided_slice %59 {offsets = [0, 32], sizes = [8, 32], strides = [1, 1]} : vector<8x128xf32> to vector<8x32xf32>
    %62 = vector.extract_strided_slice %59 {offsets = [0, 64], sizes = [8, 32], strides = [1, 1]} : vector<8x128xf32> to vector<8x32xf32>
    %63 = vector.extract_strided_slice %59 {offsets = [0, 96], sizes = [8, 32], strides = [1, 1]} : vector<8x128xf32> to vector<8x32xf32>
    %64 = arith.mulf %61, %38 : vector<8x32xf32>
    %65 = arith.mulf %60, %62 : vector<8x32xf32>
    %66 = arith.addf %64, %65 : vector<8x32xf32>
    %67 = math.tanh %66 : vector<8x32xf32>
    %68 = arith.mulf %63, %67 : vector<8x32xf32>
    %c0_i32_25 = arith.constant 0 : i32
    %69 = arith.addi %c0_i32_25, %c1_i32 : i32
    %70 = arith.index_cast %69 : i32 to index
    %c0_26 = arith.constant 0 : index
    %c0_27 = arith.constant 0 : index
    %71 = vector.load %arg6[%70, %c0_26, %c0_27] : memref<8x8x32xf32, #tpu.memory_space<vmem>>, vector<1x8x32xf32>
    %72 = vector.shape_cast %71 : vector<1x8x32xf32> to vector<8x32xf32>
    %73 = vector.shape_cast %68 : vector<8x32xf32> to vector<1x8x32xf32>
    tpu.vector_store %arg6[%70, %c0_26, %c0_27], %73 {strides = array<i32>} : memref<8x8x32xf32, #tpu.memory_space<vmem>>, vector<1x8x32xf32>,
    %c2_i32 = arith.constant 2 : i32
    %74 = arith.index_cast %c2_i32 : i32 to index
    %c0_28 = arith.constant 0 : index
    %c0_29 = arith.constant 0 : index
    %75 = vector.load %arg9[%74, %c0_28, %c0_29] : memref<8x8x128xf32, #tpu.memory_space<vmem>>, vector<1x8x128xf32>
    %76 = vector.shape_cast %75 : vector<1x8x128xf32> to vector<8x128xf32>
    %cst_30 = arith.constant dense<0.000000e+00> : vector<8x128xf32>
    %77 = tpu.matmul %68, %1, %cst_30 {dimension_numbers = #tpu.dot_dimension_numbers<[1], [0], [0], [1], [0, 0, 1, 1], [], []>} : vector<8x32xf32>, vector<32x128xf32>, vector<8x128xf32> -> vector<8x128xf32>
    %78 = arith.addf %76, %77 : vector<8x128xf32>
    %cst_31 = arith.constant 5.000000e-01 : f32
    %79 = vector.broadcast %cst_31 : f32 to vector<8x128xf32>
    %80 = arith.mulf %79, %78 : vector<8x128xf32>
    %81 = arith.select %9, %78, %80 : vector<8x128xi1>, vector<8x128xf32>
    %82 = math.tanh %81 : vector<8x128xf32>
    %cst_32 = arith.constant 5.000000e-01 : f32
    %83 = vector.broadcast %cst_32 : f32 to vector<8x128xf32>
    %84 = arith.mulf %83, %82 : vector<8x128xf32>
    %cst_33 = arith.constant 5.000000e-01 : f32
    %85 = vector.broadcast %cst_33 : f32 to vector<8x128xf32>
    %86 = arith.addf %84, %85 : vector<8x128xf32>
    %87 = arith.select %9, %82, %86 : vector<8x128xi1>, vector<8x128xf32>
    %88 = vector.extract_strided_slice %87 {offsets = [0, 0], sizes = [8, 32], strides = [1, 1]} : vector<8x128xf32> to vector<8x32xf32>
    %89 = vector.extract_strided_slice %87 {offsets = [0, 32], sizes = [8, 32], strides = [1, 1]} : vector<8x128xf32> to vector<8x32xf32>
    %90 = vector.extract_strided_slice %87 {offsets = [0, 64], sizes = [8, 32], strides = [1, 1]} : vector<8x128xf32> to vector<8x32xf32>
    %91 = vector.extract_strided_slice %87 {offsets = [0, 96], sizes = [8, 32], strides = [1, 1]} : vector<8x128xf32> to vector<8x32xf32>
    %92 = arith.mulf %89, %66 : vector<8x32xf32>
    %93 = arith.mulf %88, %90 : vector<8x32xf32>
    %94 = arith.addf %92, %93 : vector<8x32xf32>
    %95 = math.tanh %94 : vector<8x32xf32>
    %96 = arith.mulf %91, %95 : vector<8x32xf32>
    %c0_i32_34 = arith.constant 0 : i32
    %97 = arith.addi %c0_i32_34, %c2_i32 : i32
    %98 = arith.index_cast %97 : i32 to index
    %c0_35 = arith.constant 0 : index
    %c0_36 = arith.constant 0 : index
    %99 = vector.load %arg6[%98, %c0_35, %c0_36] : memref<8x8x32xf32, #tpu.memory_space<vmem>>, vector<1x8x32xf32>
    %100 = vector.shape_cast %99 : vector<1x8x32xf32> to vector<8x32xf32>
    %101 = vector.shape_cast %96 : vector<8x32xf32> to vector<1x8x32xf32>
    tpu.vector_store %arg6[%98, %c0_35, %c0_36], %101 {strides = array<i32>} : memref<8x8x32xf32, #tpu.memory_space<vmem>>, vector<1x8x32xf32>,
    %c3_i32 = arith.constant 3 : i32
    %102 = arith.index_cast %c3_i32 : i32 to index
    %c0_37 = arith.constant 0 : index
    %c0_38 = arith.constant 0 : index
    %103 = vector.load %arg9[%102, %c0_37, %c0_38] : memref<8x8x128xf32, #tpu.memory_space<vmem>>, vector<1x8x128xf32>
    %104 = vector.shape_cast %103 : vector<1x8x128xf32> to vector<8x128xf32>
    %cst_39 = arith.constant dense<0.000000e+00> : vector<8x128xf32>
    %105 = tpu.matmul %96, %1, %cst_39 {dimension_numbers = #tpu.dot_dimension_numbers<[1], [0], [0], [1], [0, 0, 1, 1], [], []>} : vector<8x32xf32>, vector<32x128xf32>, vector<8x128xf32> -> vector<8x128xf32>
    %106 = arith.addf %104, %105 : vector<8x128xf32>
    %cst_40 = arith.constant 5.000000e-01 : f32
    %107 = vector.broadcast %cst_40 : f32 to vector<8x128xf32>
    %108 = arith.mulf %107, %106 : vector<8x128xf32>
    %109 = arith.select %9, %106, %108 : vector<8x128xi1>, vector<8x128xf32>
    %110 = math.tanh %109 : vector<8x128xf32>
    %cst_41 = arith.constant 5.000000e-01 : f32
    %111 = vector.broadcast %cst_41 : f32 to vector<8x128xf32>
    %112 = arith.mulf %111, %110 : vector<8x128xf32>
    %cst_42 = arith.constant 5.000000e-01 : f32
    %113 = vector.broadcast %cst_42 : f32 to vector<8x128xf32>
    %114 = arith.addf %112, %113 : vector<8x128xf32>
    %115 = arith.select %9, %110, %114 : vector<8x128xi1>, vector<8x128xf32>
    %116 = vector.extract_strided_slice %115 {offsets = [0, 0], sizes = [8, 32], strides = [1, 1]} : vector<8x128xf32> to vector<8x32xf32>
    %117 = vector.extract_strided_slice %115 {offsets = [0, 32], sizes = [8, 32], strides = [1, 1]} : vector<8x128xf32> to vector<8x32xf32>
    %118 = vector.extract_strided_slice %115 {offsets = [0, 64], sizes = [8, 32], strides = [1, 1]} : vector<8x128xf32> to vector<8x32xf32>
    %119 = vector.extract_strided_slice %115 {offsets = [0, 96], sizes = [8, 32], strides = [1, 1]} : vector<8x128xf32> to vector<8x32xf32>
    %120 = arith.mulf %117, %94 : vector<8x32xf32>
    %121 = arith.mulf %116, %118 : vector<8x32xf32>
    %122 = arith.addf %120, %121 : vector<8x32xf32>
    %123 = math.tanh %122 : vector<8x32xf32>
    %124 = arith.mulf %119, %123 : vector<8x32xf32>
    %c0_i32_43 = arith.constant 0 : i32
    %125 = arith.addi %c0_i32_43, %c3_i32 : i32
    %126 = arith.index_cast %125 : i32 to index
    %c0_44 = arith.constant 0 : index
    %c0_45 = arith.constant 0 : index
    %127 = vector.load %arg6[%126, %c0_44, %c0_45] : memref<8x8x32xf32, #tpu.memory_space<vmem>>, vector<1x8x32xf32>
    %128 = vector.shape_cast %127 : vector<1x8x32xf32> to vector<8x32xf32>
    %129 = vector.shape_cast %124 : vector<8x32xf32> to vector<1x8x32xf32>
    tpu.vector_store %arg6[%126, %c0_44, %c0_45], %129 {strides = array<i32>} : memref<8x8x32xf32, #tpu.memory_space<vmem>>, vector<1x8x32xf32>,
    %c4_i32 = arith.constant 4 : i32
    %130 = arith.index_cast %c4_i32 : i32 to index
    %c0_46 = arith.constant 0 : index
    %c0_47 = arith.constant 0 : index
    %131 = vector.load %arg9[%130, %c0_46, %c0_47] : memref<8x8x128xf32, #tpu.memory_space<vmem>>, vector<1x8x128xf32>
    %132 = vector.shape_cast %131 : vector<1x8x128xf32> to vector<8x128xf32>
    %cst_48 = arith.constant dense<0.000000e+00> : vector<8x128xf32>
    %133 = tpu.matmul %124, %1, %cst_48 {dimension_numbers = #tpu.dot_dimension_numbers<[1], [0], [0], [1], [0, 0, 1, 1], [], []>} : vector<8x32xf32>, vector<32x128xf32>, vector<8x128xf32> -> vector<8x128xf32>
    %134 = arith.addf %132, %133 : vector<8x128xf32>
    %cst_49 = arith.constant 5.000000e-01 : f32
    %135 = vector.broadcast %cst_49 : f32 to vector<8x128xf32>
    %136 = arith.mulf %135, %134 : vector<8x128xf32>
    %137 = arith.select %9, %134, %136 : vector<8x128xi1>, vector<8x128xf32>
    %138 = math.tanh %137 : vector<8x128xf32>
    %cst_50 = arith.constant 5.000000e-01 : f32
    %139 = vector.broadcast %cst_50 : f32 to vector<8x128xf32>
    %140 = arith.mulf %139, %138 : vector<8x128xf32>
    %cst_51 = arith.constant 5.000000e-01 : f32
    %141 = vector.broadcast %cst_51 : f32 to vector<8x128xf32>
    %142 = arith.addf %140, %141 : vector<8x128xf32>
    %143 = arith.select %9, %138, %142 : vector<8x128xi1>, vector<8x128xf32>
    %144 = vector.extract_strided_slice %143 {offsets = [0, 0], sizes = [8, 32], strides = [1, 1]} : vector<8x128xf32> to vector<8x32xf32>
    %145 = vector.extract_strided_slice %143 {offsets = [0, 32], sizes = [8, 32], strides = [1, 1]} : vector<8x128xf32> to vector<8x32xf32>
    %146 = vector.extract_strided_slice %143 {offsets = [0, 64], sizes = [8, 32], strides = [1, 1]} : vector<8x128xf32> to vector<8x32xf32>
    %147 = vector.extract_strided_slice %143 {offsets = [0, 96], sizes = [8, 32], strides = [1, 1]} : vector<8x128xf32> to vector<8x32xf32>
    %148 = arith.mulf %145, %122 : vector<8x32xf32>
    %149 = arith.mulf %144, %146 : vector<8x32xf32>
    %150 = arith.addf %148, %149 : vector<8x32xf32>
    %151 = math.tanh %150 : vector<8x32xf32>
    %152 = arith.mulf %147, %151 : vector<8x32xf32>
    %c0_i32_52 = arith.constant 0 : i32
    %153 = arith.addi %c0_i32_52, %c4_i32 : i32
    %154 = arith.index_cast %153 : i32 to index
    %c0_53 = arith.constant 0 : index
    %c0_54 = arith.constant 0 : index
    %155 = vector.load %arg6[%154, %c0_53, %c0_54] : memref<8x8x32xf32, #tpu.memory_space<vmem>>, vector<1x8x32xf32>
    %156 = vector.shape_cast %155 : vector<1x8x32xf32> to vector<8x32xf32>
    %157 = vector.shape_cast %152 : vector<8x32xf32> to vector<1x8x32xf32>
    tpu.vector_store %arg6[%154, %c0_53, %c0_54], %157 {strides = array<i32>} : memref<8x8x32xf32, #tpu.memory_space<vmem>>, vector<1x8x32xf32>,
    %c5_i32 = arith.constant 5 : i32
    %158 = arith.index_cast %c5_i32 : i32 to index
    %c0_55 = arith.constant 0 : index
    %c0_56 = arith.constant 0 : index
    %159 = vector.load %arg9[%158, %c0_55, %c0_56] : memref<8x8x128xf32, #tpu.memory_space<vmem>>, vector<1x8x128xf32>
    %160 = vector.shape_cast %159 : vector<1x8x128xf32> to vector<8x128xf32>
    %cst_57 = arith.constant dense<0.000000e+00> : vector<8x128xf32>
    %161 = tpu.matmul %152, %1, %cst_57 {dimension_numbers = #tpu.dot_dimension_numbers<[1], [0], [0], [1], [0, 0, 1, 1], [], []>} : vector<8x32xf32>, vector<32x128xf32>, vector<8x128xf32> -> vector<8x128xf32>
    %162 = arith.addf %160, %161 : vector<8x128xf32>
    %cst_58 = arith.constant 5.000000e-01 : f32
    %163 = vector.broadcast %cst_58 : f32 to vector<8x128xf32>
    %164 = arith.mulf %163, %162 : vector<8x128xf32>
    %165 = arith.select %9, %162, %164 : vector<8x128xi1>, vector<8x128xf32>
    %166 = math.tanh %165 : vector<8x128xf32>
    %cst_59 = arith.constant 5.000000e-01 : f32
    %167 = vector.broadcast %cst_59 : f32 to vector<8x128xf32>
    %168 = arith.mulf %167, %166 : vector<8x128xf32>
    %cst_60 = arith.constant 5.000000e-01 : f32
    %169 = vector.broadcast %cst_60 : f32 to vector<8x128xf32>
    %170 = arith.addf %168, %169 : vector<8x128xf32>
    %171 = arith.select %9, %166, %170 : vector<8x128xi1>, vector<8x128xf32>
    %172 = vector.extract_strided_slice %171 {offsets = [0, 0], sizes = [8, 32], strides = [1, 1]} : vector<8x128xf32> to vector<8x32xf32>
    %173 = vector.extract_strided_slice %171 {offsets = [0, 32], sizes = [8, 32], strides = [1, 1]} : vector<8x128xf32> to vector<8x32xf32>
    %174 = vector.extract_strided_slice %171 {offsets = [0, 64], sizes = [8, 32], strides = [1, 1]} : vector<8x128xf32> to vector<8x32xf32>
    %175 = vector.extract_strided_slice %171 {offsets = [0, 96], sizes = [8, 32], strides = [1, 1]} : vector<8x128xf32> to vector<8x32xf32>
    %176 = arith.mulf %173, %150 : vector<8x32xf32>
    %177 = arith.mulf %172, %174 : vector<8x32xf32>
    %178 = arith.addf %176, %177 : vector<8x32xf32>
    %179 = math.tanh %178 : vector<8x32xf32>
    %180 = arith.mulf %175, %179 : vector<8x32xf32>
    %c0_i32_61 = arith.constant 0 : i32
    %181 = arith.addi %c0_i32_61, %c5_i32 : i32
    %182 = arith.index_cast %181 : i32 to index
    %c0_62 = arith.constant 0 : index
    %c0_63 = arith.constant 0 : index
    %183 = vector.load %arg6[%182, %c0_62, %c0_63] : memref<8x8x32xf32, #tpu.memory_space<vmem>>, vector<1x8x32xf32>
    %184 = vector.shape_cast %183 : vector<1x8x32xf32> to vector<8x32xf32>
    %185 = vector.shape_cast %180 : vector<8x32xf32> to vector<1x8x32xf32>
    tpu.vector_store %arg6[%182, %c0_62, %c0_63], %185 {strides = array<i32>} : memref<8x8x32xf32, #tpu.memory_space<vmem>>, vector<1x8x32xf32>,
    %c6_i32 = arith.constant 6 : i32
    %186 = arith.index_cast %c6_i32 : i32 to index
    %c0_64 = arith.constant 0 : index
    %c0_65 = arith.constant 0 : index
    %187 = vector.load %arg9[%186, %c0_64, %c0_65] : memref<8x8x128xf32, #tpu.memory_space<vmem>>, vector<1x8x128xf32>
    %188 = vector.shape_cast %187 : vector<1x8x128xf32> to vector<8x128xf32>
    %cst_66 = arith.constant dense<0.000000e+00> : vector<8x128xf32>
    %189 = tpu.matmul %180, %1, %cst_66 {dimension_numbers = #tpu.dot_dimension_numbers<[1], [0], [0], [1], [0, 0, 1, 1], [], []>} : vector<8x32xf32>, vector<32x128xf32>, vector<8x128xf32> -> vector<8x128xf32>
    %190 = arith.addf %188, %189 : vector<8x128xf32>
    %cst_67 = arith.constant 5.000000e-01 : f32
    %191 = vector.broadcast %cst_67 : f32 to vector<8x128xf32>
    %192 = arith.mulf %191, %190 : vector<8x128xf32>
    %193 = arith.select %9, %190, %192 : vector<8x128xi1>, vector<8x128xf32>
    %194 = math.tanh %193 : vector<8x128xf32>
    %cst_68 = arith.constant 5.000000e-01 : f32
    %195 = vector.broadcast %cst_68 : f32 to vector<8x128xf32>
    %196 = arith.mulf %195, %194 : vector<8x128xf32>
    %cst_69 = arith.constant 5.000000e-01 : f32
    %197 = vector.broadcast %cst_69 : f32 to vector<8x128xf32>
    %198 = arith.addf %196, %197 : vector<8x128xf32>
    %199 = arith.select %9, %194, %198 : vector<8x128xi1>, vector<8x128xf32>
    %200 = vector.extract_strided_slice %199 {offsets = [0, 0], sizes = [8, 32], strides = [1, 1]} : vector<8x128xf32> to vector<8x32xf32>
    %201 = vector.extract_strided_slice %199 {offsets = [0, 32], sizes = [8, 32], strides = [1, 1]} : vector<8x128xf32> to vector<8x32xf32>
    %202 = vector.extract_strided_slice %199 {offsets = [0, 64], sizes = [8, 32], strides = [1, 1]} : vector<8x128xf32> to vector<8x32xf32>
    %203 = vector.extract_strided_slice %199 {offsets = [0, 96], sizes = [8, 32], strides = [1, 1]} : vector<8x128xf32> to vector<8x32xf32>
    %204 = arith.mulf %201, %178 : vector<8x32xf32>
    %205 = arith.mulf %200, %202 : vector<8x32xf32>
    %206 = arith.addf %204, %205 : vector<8x32xf32>
    %207 = math.tanh %206 : vector<8x32xf32>
    %208 = arith.mulf %203, %207 : vector<8x32xf32>
    %c0_i32_70 = arith.constant 0 : i32
    %209 = arith.addi %c0_i32_70, %c6_i32 : i32
    %210 = arith.index_cast %209 : i32 to index
    %c0_71 = arith.constant 0 : index
    %c0_72 = arith.constant 0 : index
    %211 = vector.load %arg6[%210, %c0_71, %c0_72] : memref<8x8x32xf32, #tpu.memory_space<vmem>>, vector<1x8x32xf32>
    %212 = vector.shape_cast %211 : vector<1x8x32xf32> to vector<8x32xf32>
    %213 = vector.shape_cast %208 : vector<8x32xf32> to vector<1x8x32xf32>
    tpu.vector_store %arg6[%210, %c0_71, %c0_72], %213 {strides = array<i32>} : memref<8x8x32xf32, #tpu.memory_space<vmem>>, vector<1x8x32xf32>,
    %c7_i32 = arith.constant 7 : i32
    %214 = arith.index_cast %c7_i32 : i32 to index
    %c0_73 = arith.constant 0 : index
    %c0_74 = arith.constant 0 : index
    %215 = vector.load %arg9[%214, %c0_73, %c0_74] : memref<8x8x128xf32, #tpu.memory_space<vmem>>, vector<1x8x128xf32>
    %216 = vector.shape_cast %215 : vector<1x8x128xf32> to vector<8x128xf32>
    %cst_75 = arith.constant dense<0.000000e+00> : vector<8x128xf32>
    %217 = tpu.matmul %208, %1, %cst_75 {dimension_numbers = #tpu.dot_dimension_numbers<[1], [0], [0], [1], [0, 0, 1, 1], [], []>} : vector<8x32xf32>, vector<32x128xf32>, vector<8x128xf32> -> vector<8x128xf32>
    %218 = arith.addf %216, %217 : vector<8x128xf32>
    %cst_76 = arith.constant 5.000000e-01 : f32
    %219 = vector.broadcast %cst_76 : f32 to vector<8x128xf32>
    %220 = arith.mulf %219, %218 : vector<8x128xf32>
    %221 = arith.select %9, %218, %220 : vector<8x128xi1>, vector<8x128xf32>
    %222 = math.tanh %221 : vector<8x128xf32>
    %cst_77 = arith.constant 5.000000e-01 : f32
    %223 = vector.broadcast %cst_77 : f32 to vector<8x128xf32>
    %224 = arith.mulf %223, %222 : vector<8x128xf32>
    %cst_78 = arith.constant 5.000000e-01 : f32
    %225 = vector.broadcast %cst_78 : f32 to vector<8x128xf32>
    %226 = arith.addf %224, %225 : vector<8x128xf32>
    %227 = arith.select %9, %222, %226 : vector<8x128xi1>, vector<8x128xf32>
    %228 = vector.extract_strided_slice %227 {offsets = [0, 0], sizes = [8, 32], strides = [1, 1]} : vector<8x128xf32> to vector<8x32xf32>
    %229 = vector.extract_strided_slice %227 {offsets = [0, 32], sizes = [8, 32], strides = [1, 1]} : vector<8x128xf32> to vector<8x32xf32>
    %230 = vector.extract_strided_slice %227 {offsets = [0, 64], sizes = [8, 32], strides = [1, 1]} : vector<8x128xf32> to vector<8x32xf32>
    %231 = vector.extract_strided_slice %227 {offsets = [0, 96], sizes = [8, 32], strides = [1, 1]} : vector<8x128xf32> to vector<8x32xf32>
    %232 = arith.mulf %229, %206 : vector<8x32xf32>
    %233 = arith.mulf %228, %230 : vector<8x32xf32>
    %234 = arith.addf %232, %233 : vector<8x32xf32>
    %235 = math.tanh %234 : vector<8x32xf32>
    %236 = arith.mulf %231, %235 : vector<8x32xf32>
    %c0_i32_79 = arith.constant 0 : i32
    %237 = arith.addi %c0_i32_79, %c7_i32 : i32
    %238 = arith.index_cast %237 : i32 to index
    %c0_80 = arith.constant 0 : index
    %c0_81 = arith.constant 0 : index
    %239 = vector.load %arg6[%238, %c0_80, %c0_81] : memref<8x8x32xf32, #tpu.memory_space<vmem>>, vector<1x8x32xf32>
    %240 = vector.shape_cast %239 : vector<1x8x32xf32> to vector<8x32xf32>
    %241 = vector.shape_cast %236 : vector<8x32xf32> to vector<1x8x32xf32>
    tpu.vector_store %arg6[%238, %c0_80, %c0_81], %241 {strides = array<i32>} : memref<8x8x32xf32, #tpu.memory_space<vmem>>, vector<1x8x32xf32>,
    %c8_i32 = arith.constant 8 : i32
    %c0_82 = arith.constant 0 : index
    %c0_83 = arith.constant 0 : index
    %c0_84 = arith.constant 0 : index
    %242 = vector.load %arg7[%c0_82, %c0_83, %c0_84] : memref<1x8x32xf32, #tpu.memory_space<vmem>>, vector<1x8x32xf32>
    %243 = vector.shape_cast %242 : vector<1x8x32xf32> to vector<8x32xf32>
    %244 = vector.shape_cast %236 : vector<8x32xf32> to vector<1x8x32xf32>
    tpu.vector_store %arg7[%c0_82, %c0_83, %c0_84], %244 {strides = array<i32>} : memref<1x8x32xf32, #tpu.memory_space<vmem>>, vector<1x8x32xf32>,
    %c0_85 = arith.constant 0 : index
    %c0_86 = arith.constant 0 : index
    %c0_87 = arith.constant 0 : index
    %245 = vector.load %arg8[%c0_85, %c0_86, %c0_87] : memref<1x8x32xf32, #tpu.memory_space<vmem>>, vector<1x8x32xf32>
    %246 = vector.shape_cast %245 : vector<1x8x32xf32> to vector<8x32xf32>
    %247 = vector.shape_cast %234 : vector<8x32xf32> to vector<1x8x32xf32>
    tpu.vector_store %arg8[%c0_85, %c0_86, %c0_87], %247 {strides = array<i32>} : memref<1x8x32xf32, #tpu.memory_space<vmem>>, vector<1x8x32xf32>,
    return
  }
  func.func @transform_0(%arg0: i32, %arg1: i32) -> (i32, i32, i32) {
    %c0_i32 = arith.constant 0 : i32
    %c0_i32_0 = arith.constant 0 : i32
    %c0_i32_1 = arith.constant 0 : i32
    return %c0_i32, %arg0, %c0_i32_0 : i32, i32, i32
  }
  func.func @transform_1(%arg0: i32, %arg1: i32) -> (i32, i32, i32) {
    %c0_i32 = arith.constant 0 : i32
    %c0_i32_0 = arith.constant 0 : i32
    %c0_i32_1 = arith.constant 0 : i32
    return %arg1, %c0_i32, %c0_i32_0 : i32, i32, i32
  }
  func.func @transform_2(%arg0: i32, %arg1: i32) -> (i32, i32, i32) {
    %c0_i32 = arith.constant 0 : i32
    %c0_i32_0 = arith.constant 0 : i32
    %c0_i32_1 = arith.constant 0 : i32
    return %arg1, %c0_i32, %c0_i32_0 : i32, i32, i32
  }
  func.func @transform_3(%arg0: i32, %arg1: i32) -> (i32, i32, i32) {
    %c0_i32 = arith.constant 0 : i32
    %c0_i32_0 = arith.constant 0 : i32
    %c0_i32_1 = arith.constant 0 : i32
    return %arg1, %c0_i32, %c0_i32_0 : i32, i32, i32
  }
  func.func @transform_4(%arg0: i32, %arg1: i32) -> (i32, i32, i32) {
    %c0_i32 = arith.constant 0 : i32
    %c0_i32_0 = arith.constant 0 : i32
    %c0_i32_1 = arith.constant 0 : i32
    return %c0_i32, %arg0, %c0_i32_0 : i32, i32, i32
  }
  func.func @transform_5(%arg0: i32, %arg1: i32) -> (i32, i32, i32) {
    %c0_i32 = arith.constant 0 : i32
    %c0_i32_0 = arith.constant 0 : i32
    return %arg1, %arg0, %c0_i32 : i32, i32, i32
  }
  func.func @transform_6(%arg0: i32, %arg1: i32) -> (i32, i32, i32) {
    %c0_i32 = arith.constant 0 : i32
    %c0_i32_0 = arith.constant 0 : i32
    return %arg1, %arg0, %c0_i32 : i32, i32, i32
  }
}

</mosaic_0001>

<llo_original>
// kernel: encoder_forward.1
$region0: #{encoder_forward.1}
  #allocation0 [shape = 'u32[]', space=smem, size = 0x4, offset = 0x4, fixed_abs, tag = 'smem constant byte address 0x4 - core index']
  #allocation1 [shape = 'u32[144,128]{1,0:T(1,128)}', space=vmem, size = 0x12000, scoped, tag = 'internal scratch']
  #allocation2 [shape = 'f32[8,8,128]{2,1,0:T(8,128)}', space=vmem, size = 0x8000, scoped, tag = 'scratch operand']
  %s0 = inlined_call_operand.vmem [shape: f32[8,8,16], index: 0, kind: input, shape index: {}]
  %s1 = inlined_call_operand.vmem [shape: f32[2,32,128], index: 1, kind: input, shape index: {}]
  %s2 = inlined_call_operand.vmem [shape: f32[2,32,128], index: 2, kind: input, shape index: {}]
  %s3 = inlined_call_operand.vmem [shape: f32[2,1,128], index: 3, kind: input, shape index: {}]
  %s4 = inlined_call_operand.vmem [shape: f32[8,8,32], index: 4, kind: output, shape index: {0}]
  %s5 = inlined_call_operand.vmem [shape: f32[2,8,32], index: 5, kind: output, shape index: {1}]
  %s6 = inlined_call_operand.vmem [shape: f32[2,8,32], index: 6, kind: output, shape index: {2}]
  %7 = xla_tuple %s4, %s5, %s6
  %s8 = sld [smem:[#allocation0]]
  $region73: #{encoder_forward.1} parent=0
    _
  %s10 = ssub.s32 1, %s8
  %s11 = scalar_select 0, %s10, %s8
  loop: start=0, step=1, limit=4
  $region2: #{encoder_forward.1} parent=0 // loop_pre_header
    _
  $region3: #{encoder_forward.1} parent=0 // loop_header
    %s13 = sphi 0, %s17
    %p14 = scmp.ge.s32.totalorder %s13, 4
    %s20 = sphi 0, %s32
    %s21 = sphi 0, %s28
    %s22 = sphi 0, %s20
    %s23 = sphi 0, %s21
    %s24 = sphi 0, %s22
    %s25 = sphi 0, %s23
    %s35 = sphi 0, %s37
    %s38 = sphi 0, %s35
    %s39 = sphi 0, %s38
    %s55 = sphi 0, %s39
    %s61 = sphi 0, %s63
    %s64 = sphi 0, %s61
    %s65 = sphi 0, %s64
    %s81 = sphi 0, %s65
    %s87 = sphi 0, %s89
    %s90 = sphi 0, %s87
    %s91 = sphi 0, %s90
    %s107 = sphi 0, %s91
    %s113 = sphi 0, %s115
    %s116 = sphi 0, %s113
    %s117 = sphi 0, %s116
    %s133 = sphi 0, %s117
    %s139 = sphi 0, %s141
    %s142 = sphi 0, %s139
    %s143 = sphi 0, %s142
    %s159 = sphi 0, %s143
    %s167 = sphi 0, %s169
    %s170 = sphi 0, %s167
    %s171 = sphi 0, %s170
    %s187 = sphi 0, %s171
    %s195 = sphi 0, %s197
    %s198 = sphi 0, %s195
    %s199 = sphi 0, %s198
    %s215 = sphi 0, %s199
  $region4: #{encoder_forward.1} parent=0 // loop_header_branch
    %16 = sbr.rel (%p14) target = $region8
  $region5: #{encoder_forward.1} parent=0 // loop_body
    %s18 = ssub.s32 %s13, 1
    %s19 = ssub.s32 %s13, 2
    %s26 = sadd.s32 1, %s21
    %p27 = scmp.ge.s32.totalorder %s26, 2
    %s28 = scalar_select %p27, 0, %s26
    %s29 = sadd.s32 1, %s20
    %s30 = scalar_select %p27, %s29, %s20
    %p31 = scmp.ge.s32.totalorder %s30, 1
    %s32 = scalar_select %p31, 0, %s30
    %s33 = ssub.s32 %s20, %s32
    %p34 = scmp.eq.s32.totalorder %s33, 0
    %s36 = sadd.s32 %s35, 1
    %s37 = scalar_select %p34, %s35, %s36
    %p40 = pneg %p34
    %p41 = scmp.eq.s32.totalorder %s13, 1
    %p42 = por %p40, %p41
    %p43 = scmp.ne.s32.totalorder %s35, %s38
    %p44 = scmp.eq.s32.totalorder %s13, 0
    %p45 = por %p43, %p44
    %p46 = scmp.ne.s32.totalorder %s35, %s38
    %p47 = scmp.eq.s32.totalorder %s18, 1
    %p48 = por %p46, %p47
    %p49 = scmp.ne.s32.totalorder %s38, %s39
    %p50 = scmp.eq.s32.totalorder %s18, 0
    %p51 = por %p49, %p50
    %p52 = scmp.ne.s32.totalorder %s38, %s39
    %p53 = scmp.eq.s32.totalorder %s19, 1
    %p54 = por %p52, %p53
    %p56 = scmp.ne.s32.totalorder %s39, %s55
    %p57 = scmp.eq.s32.totalorder %s19, 0
    %p58 = por %p56, %p57
    %s59 = ssub.s32 %s21, %s28
    %p60 = scmp.eq.s32.totalorder %s59, 0
    %s62 = sadd.s32 %s61, 1
    %s63 = scalar_select %p60, %s61, %s62
    %p66 = pneg %p60
    %p67 = scmp.eq.s32.totalorder %s13, 1
    %p68 = por %p66, %p67
    %p69 = scmp.ne.s32.totalorder %s61, %s64
    %p70 = scmp.eq.s32.totalorder %s13, 0
    %p71 = por %p69, %p70
    %p72 = scmp.ne.s32.totalorder %s61, %s64
    %p73 = scmp.eq.s32.totalorder %s18, 1
    %p74 = por %p72, %p73
    %p75 = scmp.ne.s32.totalorder %s64, %s65
    %p76 = scmp.eq.s32.totalorder %s18, 0
    %p77 = por %p75, %p76
    %p78 = scmp.ne.s32.totalorder %s64, %s65
    %p79 = scmp.eq.s32.totalorder %s19, 1
    %p80 = por %p78, %p79
    %p82 = scmp.ne.s32.totalorder %s65, %s81
    %p83 = scmp.eq.s32.totalorder %s19, 0
    %p84 = por %p82, %p83
    %s85 = ssub.s32 %s21, %s28
    %p86 = scmp.eq.s32.totalorder %s85, 0
    %s88 = sadd.s32 %s87, 1
    %s89 = scalar_select %p86, %s87, %s88
    %p92 = pneg %p86
    %p93 = scmp.eq.s32.totalorder %s13, 1
    %p94 = por %p92, %p93
    %p95 = scmp.ne.s32.totalorder %s87, %s90
    %p96 = scmp.eq.s32.totalorder %s13, 0
    %p97 = por %p95, %p96
    %p98 = scmp.ne.s32.totalorder %s87, %s90
    %p99 = scmp.eq.s32.totalorder %s18, 1
    %p100 = por %p98, %p99
    %p101 = scmp.ne.s32.totalorder %s90, %s91
    %p102 = scmp.eq.s32.totalorder %s18, 0
    %p103 = por %p101, %p102
    %p104 = scmp.ne.s32.totalorder %s90, %s91
    %p105 = scmp.eq.s32.totalorder %s19, 1
    %p106 = por %p104, %p105
    %p108 = scmp.ne.s32.totalorder %s91, %s107
    %p109 = scmp.eq.s32.totalorder %s19, 0
    %p110 = por %p108, %p109
    %s111 = ssub.s32 %s21, %s28
    %p112 = scmp.eq.s32.totalorder %s111, 0
    %s114 = sadd.s32 %s113, 1
    %s115 = scalar_select %p112, %s113, %s114
    %p118 = pneg %p112
    %p119 = scmp.eq.s32.totalorder %s13, 1
    %p120 = por %p118, %p119
    %p121 = scmp.ne.s32.totalorder %s113, %s116
    %p122 = scmp.eq.s32.totalorder %s13, 0
    %p123 = por %p121, %p122
    %p124 = scmp.ne.s32.totalorder %s113, %s116
    %p125 = scmp.eq.s32.totalorder %s18, 1
    %p126 = por %p124, %p125
    %p127 = scmp.ne.s32.totalorder %s116, %s117
    %p128 = scmp.eq.s32.totalorder %s18, 0
    %p129 = por %p127, %p128
    %p130 = scmp.ne.s32.totalorder %s116, %s117
    %p131 = scmp.eq.s32.totalorder %s19, 1
    %p132 = por %p130, %p131
    %p134 = scmp.ne.s32.totalorder %s117, %s133
    %p135 = scmp.eq.s32.totalorder %s19, 0
    %p136 = por %p134, %p135
    %s137 = ssub.s32 %s20, %s32
    %p138 = scmp.eq.s32.totalorder %s137, 0
    %s140 = sadd.s32 %s139, 1
    %s141 = scalar_select %p138, %s139, %s140
    %p144 = pneg %p138
    %p145 = scmp.eq.s32.totalorder %s13, 1
    %p146 = por %p144, %p145
    %p147 = scmp.ne.s32.totalorder %s139, %s142
    %p148 = scmp.eq.s32.totalorder %s13, 0
    %p149 = por %p147, %p148
    %p150 = scmp.ne.s32.totalorder %s139, %s142
    %p151 = scmp.eq.s32.totalorder %s18, 1
    %p152 = por %p150, %p151
    %p153 = scmp.ne.s32.totalorder %s142, %s143
    %p154 = scmp.eq.s32.totalorder %s18, 0
    %p155 = por %p153, %p154
    %p156 = scmp.ne.s32.totalorder %s142, %s143
    %p157 = scmp.eq.s32.totalorder %s19, 1
    %p158 = por %p156, %p157
    %p160 = scmp.ne.s32.totalorder %s143, %s159
    %p161 = scmp.eq.s32.totalorder %s19, 0
    %p162 = por %p160, %p161
    %s163 = ssub.s32 %s21, %s28
    %s164 = ssub.s32 %s20, %s32
    %s165 = sor.u32 %s163, %s164
    %p166 = scmp.eq.s32.totalorder %s165, 0
    %s168 = sadd.s32 %s167, 1
    %s169 = scalar_select %p166, %s167, %s168
    %p172 = pneg %p166
    %p173 = scmp.eq.s32.totalorder %s13, 1
    %p174 = por %p172, %p173
    %p175 = scmp.ne.s32.totalorder %s167, %s170
    %p176 = scmp.eq.s32.totalorder %s13, 0
    %p177 = por %p175, %p176
    %p178 = scmp.ne.s32.totalorder %s167, %s170
    %p179 = scmp.eq.s32.totalorder %s18, 1
    %p180 = por %p178, %p179
    %p181 = scmp.ne.s32.totalorder %s170, %s171
    %p182 = scmp.eq.s32.totalorder %s18, 0
    %p183 = por %p181, %p182
    %p184 = scmp.ne.s32.totalorder %s170, %s171
    %p185 = scmp.eq.s32.totalorder %s19, 1
    %p186 = por %p184, %p185
    %p188 = scmp.ne.s32.totalorder %s171, %s187
    %p189 = scmp.eq.s32.totalorder %s19, 0
    %p190 = por %p188, %p189
    %s191 = ssub.s32 %s21, %s28
    %s192 = ssub.s32 %s20, %s32
    %s193 = sor.u32 %s191, %s192
    %p194 = scmp.eq.s32.totalorder %s193, 0
    %s196 = sadd.s32 %s195, 1
    %s197 = scalar_select %p194, %s195, %s196
    %p200 = pneg %p194
    %p201 = scmp.eq.s32.totalorder %s13, 1
    %p202 = por %p200, %p201
    %p203 = scmp.ne.s32.totalorder %s195, %s198
    %p204 = scmp.eq.s32.totalorder %s13, 0
    %p205 = por %p203, %p204
    %p206 = scmp.ne.s32.totalorder %s195, %s198
    %p207 = scmp.eq.s32.totalorder %s18, 1
    %p208 = por %p206, %p207
    %p209 = scmp.ne.s32.totalorder %s198, %s199
    %p210 = scmp.eq.s32.totalorder %s18, 0
    %p211 = por %p209, %p210
    %p212 = scmp.ne.s32.totalorder %s198, %s199
    %p213 = scmp.eq.s32.totalorder %s19, 1
    %p214 = por %p212, %p213
    %p216 = scmp.ne.s32.totalorder %s199, %s215
    %p217 = scmp.eq.s32.totalorder %s19, 0
    %p218 = por %p216, %p217
    %p219 = scmp.le.s32.totalorder 1, %s13
    %p220 = scmp.lt.s32.totalorder %s13, 3
    %p221 = pnand %p219, %p220
    %p222 = pneg %p221
    // Predicated region
    $region9: #{encoder_forward.1} parent=5 // pred_check
      _
    $region10: #{encoder_forward.1} parent=5 // pred_check_branch
      %224 = sbr.rel (%p221) target = $region12
    $region11: #{encoder_forward.1} parent=5 // pred_region
      %s225 = ssub.s32 %s13, 1
      // Predicated region
      $region13: #{encoder_forward.1} parent=11 // pred_check
        %p226 = pneg %p51
      $region14: #{encoder_forward.1} parent=11 // pred_check_branch
        %228 = sbr.rel (%p226) target = $region16
      $region15: #{encoder_forward.1} parent=11 // pred_region
        %p229 = scmp.lt.s32.totalorder %s22, 0
        %s230 = scalar_select %p229, %s22, 0
        %s231 = smul.addr %s230, 8
        %s232 = scalar_lea.vmem %s0, %s231
      $region16: #{encoder_forward.1} parent=11 // pred_fallthru
        _
    $region12: #{encoder_forward.1} parent=5 // pred_fallthru
      _
    %p233 = scmp.lt.s32.totalorder %s13, 2
    // Predicated region
    $region17: #{encoder_forward.1} parent=5 // pred_check
      %p234 = pneg %p233
    $region18: #{encoder_forward.1} parent=5 // pred_check_branch
      %236 = sbr.rel (%p234) target = $region20
    $region19: #{encoder_forward.1} parent=5 // pred_region
      // Predicated region
      $region21: #{encoder_forward.1} parent=19 // pred_check
        %p237 = pneg %p71
      $region22: #{encoder_forward.1} parent=19 // pred_check_branch
        %239 = sbr.rel (%p237) target = $region24
      $region23: #{encoder_forward.1} parent=19 // pred_region
        %p240 = scmp.lt.s32.totalorder %s21, 1
        %s241 = scalar_select %p240, %s21, 1
        %s242 = smul.addr %s241, 4
        %s243 = smul.addr %s242, 8
        %s244 = scalar_lea.vmem %s1, %s243
      $region24: #{encoder_forward.1} parent=19 // pred_fallthru
        _
      // Predicated region
      $region25: #{encoder_forward.1} parent=19 // pred_check
        %p245 = pneg %p97
      $region26: #{encoder_forward.1} parent=19 // pred_check_branch
        %247 = sbr.rel (%p245) target = $region28
      $region27: #{encoder_forward.1} parent=19 // pred_region
        %p248 = scmp.lt.s32.totalorder %s21, 1
        %s249 = scalar_select %p248, %s21, 1
        %s250 = smul.addr %s249, 4
        %s251 = smul.addr %s250, 8
        %s252 = scalar_lea.vmem %s2, %s251
      $region28: #{encoder_forward.1} parent=19 // pred_fallthru
        _
      // Predicated region
      $region29: #{encoder_forward.1} parent=19 // pred_check
        %p253 = pneg %p123
      $region30: #{encoder_forward.1} parent=19 // pred_check_branch
        %255 = sbr.rel (%p253) target = $region32
      $region31: #{encoder_forward.1} parent=19 // pred_region
        %p256 = scmp.lt.s32.totalorder %s21, 1
        %s257 = scalar_select %p256, %s21, 1
        %s258 = scalar_lea.vmem %s3, %s257
      $region32: #{encoder_forward.1} parent=19 // pred_fallthru
        _
    $region20: #{encoder_forward.1} parent=5 // pred_fallthru
      _
    %p259 = scmp.le.s32.totalorder 1, %s13
    %p260 = scmp.lt.s32.totalorder %s13, 3
    %p261 = pnand %p259, %p260
    %p262 = pneg %p261
    // Predicated region
    $region33: #{encoder_forward.1} parent=5 // pred_check
      _
    $region34: #{encoder_forward.1} parent=5 // pred_check_branch
      %264 = sbr.rel (%p261) target = $region36
    $region35: #{encoder_forward.1} parent=5 // pred_region
      %s265 = ssub.s32 %s13, 1
      %p266 = scmp.lt.s32.totalorder %s22, 0
      %s267 = scalar_select %p266, %s22, 0
      %s268 = smul.addr %s267, 8
      %s269 = scalar_lea.vmem %s0, %s268
      %p270 = pneg %p51
      %p271 = pneg %p48
      %p272 = scmp.lt.s32.totalorder %s23, 1
      %s273 = scalar_select %p272, %s23, 1
      %s274 = smul.addr %s273, 4
      %s275 = smul.addr %s274, 8
      %s276 = scalar_lea.vmem %s1, %s275
      %p277 = pneg %p77
      %p278 = pneg %p74
      %p279 = scmp.lt.s32.totalorder %s23, 1
      %s280 = scalar_select %p279, %s23, 1
      %s281 = smul.addr %s280, 4
      %s282 = smul.addr %s281, 8
      %s283 = scalar_lea.vmem %s2, %s282
      %p284 = pneg %p103
      %p285 = pneg %p100
      %p286 = scmp.lt.s32.totalorder %s23, 1
      %s287 = scalar_select %p286, %s23, 1
      %s288 = scalar_lea.vmem %s3, %s287
      %p289 = pneg %p129
      %p290 = pneg %p126
      %p291 = pneg %p155
      %p292 = pneg %p152
      %p293 = scmp.lt.s32.totalorder %s22, 0
      %s294 = scalar_select %p293, %s22, 0
      %s295 = smul.addr %s294, 8
      %s296 = scalar_lea.vmem %s4, %s295
      %p297 = pneg %p183
      %p298 = pneg %p180
      %p299 = scmp.lt.s32.totalorder %s23, 1
      %s300 = scalar_select %p299, %s23, 1
      %p301 = scmp.lt.s32.totalorder %s22, 0
      %s302 = scalar_select %p301, %s22, 0
      %s303 = sadd.s32 %s302, %s300
      %s304 = smul.addr %s303, 8
      %s305 = scalar_lea.vmem %s5, %s304
      %p306 = pneg %p211
      %p307 = pneg %p208
      %p308 = scmp.lt.s32.totalorder %s23, 1
      %s309 = scalar_select %p308, %s23, 1
      %p310 = scmp.lt.s32.totalorder %s22, 0
      %s311 = scalar_select %p310, %s22, 0
      %s312 = sadd.s32 %s311, %s309
      %s313 = smul.addr %s312, 8
      %s314 = scalar_lea.vmem %s6, %s313
      %p315 = scmp.lt.s32.totalorder %s22, 0
      %s316 = scalar_select %p315, %s22, 0
      %s317 = smul.addr %s316, 8
      %s318 = scalar_lea.vmem %s0, %s317
      %p319 = scmp.lt.s32.totalorder %s23, 1
      %s320 = scalar_select %p319, %s23, 1
      %s321 = smul.addr %s320, 4
      %s322 = smul.addr %s321, 8
      %s323 = scalar_lea.vmem %s1, %s322
      %p324 = scmp.lt.s32.totalorder %s23, 1
      %s325 = scalar_select %p324, %s23, 1
      %s326 = smul.addr %s325, 4
      %s327 = smul.addr %s326, 8
      %s328 = scalar_lea.vmem %s2, %s327
      %p329 = scmp.lt.s32.totalorder %s23, 1
      %s330 = scalar_select %p329, %s23, 1
      %s331 = scalar_lea.vmem %s3, %s330
      %p332 = scmp.lt.s32.totalorder %s22, 0
      %s333 = scalar_select %p332, %s22, 0
      %s334 = smul.addr %s333, 8
      %s335 = scalar_lea.vmem %s4, %s334
      %p336 = scmp.lt.s32.totalorder %s23, 1
      %s337 = scalar_select %p336, %s23, 1
      %p338 = scmp.lt.s32.totalorder %s22, 0
      %s339 = scalar_select %p338, %s22, 0
      %s340 = sadd.s32 %s339, %s337
      %s341 = smul.addr %s340, 8
      %s342 = scalar_lea.vmem %s5, %s341
      %p343 = scmp.lt.s32.totalorder %s23, 1
      %s344 = scalar_select %p343, %s23, 1
      %p345 = scmp.lt.s32.totalorder %s22, 0
      %s346 = scalar_select %p345, %s22, 0
      %s347 = sadd.s32 %s346, %s344
      %s348 = smul.addr %s347, 8
      %s349 = scalar_lea.vmem %s6, %s348
      %v350 = vld [vmem:[%s328] sm:$0xff]
      %v351 = vld [vmem:[%s328 + $0x8] sm:$0xff]
      %v352 = vld [vmem:[%s328 + $0x10] sm:$0xff]
      %v353 = vld [vmem:[%s328 + $0x18] sm:$0xff]
      %v354 = vld [vmem:[%s331] sm:$0x1]
      %v355 = vlaneseq
      %v356 = vand.u32 %v355, 127
      %vm357 = vcmp.ge.s32.totalorder %v356, 64
      %vm358 = vcmp.lt.s32.totalorder %v356, 96
      %vm359 = vmand %vm357, %vm358
      %p360 = scmp.eq.s32.totalorder %s23, 0
      // Predicated region
      $region37: #{encoder_forward.1} parent=35 // pred_check
        %p361 = pneg %p360
      $region38: #{encoder_forward.1} parent=35 // pred_check_branch
        %363 = sbr.rel (%p361) target = $region40
      $region39: #{encoder_forward.1} parent=35 // pred_region
        %v364 = vld [vmem:[%s318] sm:$0xff]
        %v365 = vld [vmem:[%s318 + $0x8] sm:$0xff]
        %v366 = vld [vmem:[%s318 + $0x10] sm:$0xff]
        %v367 = vld [vmem:[%s318 + $0x18] sm:$0xff]
        %v368 = vld [vmem:[%s318 + $0x20] sm:$0xff]
        %v369 = vld [vmem:[%s318 + $0x28] sm:$0xff]
        %v370 = vld [vmem:[%s318 + $0x30] sm:$0xff]
        %v371 = vld [vmem:[%s318 + $0x38] sm:$0xff]
        %v372 = vld [vmem:[%s323] sm:$0xff]
        %v373 = vld [vmem:[%s323 + $0x8] sm:$0xff]
        %v375 = vlaneseq
        %v376 = vshrl.u32 %v375, 7
        %v377 = vsub.s32 0, %v376
        %v378 = vrot.slane %v354, %v377
        %vm380 = vcmask 130048
        %v382 = vsel %vm380, %v364, 0
        %v385 = vsel %vm380, %v365, 0
        %v388 = vsel %vm380, %v366, 0
        %v391 = vsel %vm380, %v367, 0
        %v394 = vsel %vm380, %v368, 0
        %v397 = vsel %vm380, %v369, 0
        %v400 = vsel %vm380, %v370, 0
        %v403 = vsel %vm380, %v371, 0
        %405 = vmatprep.subr.mxu0 0.0
        %406 = vmatpush1.msra.mxu0 %v372
        %407 = vmatprep.subr.mxu0 0.0
        %408 = vmatpush1.msra.mxu0 %v373
        %409 = vmatprep.subr.mxu0 0.0
        %410 = vmatpush1.msra.mxu0 0.0
        %411 = vmatprep.subr.mxu0 0.0
        %412 = vmatpush1.msra.mxu0 0.0
        %413 = vmatprep.subr.mxu0 0.0
        %414 = vmatpush1.msra.mxu0 0.0
        %415 = vmatprep.subr.mxu0 0.0
        %416 = vmatpush1.msra.mxu0 0.0
        %417 = vmatprep.subr.mxu0 0.0
        %418 = vmatpush1.msra.mxu0 0.0
        %419 = vmatprep.subr.mxu0 0.0
        %420 = vmatpush1.msra.mxu0 0.0
        %421 = vmatprep.subr.mxu0 0.0
        %422 = vmatpush1.msra.mxu0 0.0
        %423 = vmatprep.subr.mxu0 0.0
        %424 = vmatpush1.msra.mxu0 0.0
        %425 = vmatprep.subr.mxu0 0.0
        %426 = vmatpush1.msra.mxu0 0.0
        %427 = vmatprep.subr.mxu0 0.0
        %428 = vmatpush1.msra.mxu0 0.0
        %429 = vmatprep.subr.mxu0 0.0
        %430 = vmatpush1.msra.mxu0 0.0
        %431 = vmatprep.subr.mxu0 0.0
        %432 = vmatpush1.msra.mxu0 0.0
        %433 = vmatprep.subr.mxu0 0.0
        %434 = vmatpush1.msra.mxu0 0.0
        %435 = vmatprep.subr.mxu0 0.0
        %436 = vmatpush1.msra.mxu0 0.0
        %437 = vmatprep.subr.mxu0 0.0
        %438 = vmatpush1.msra.mxu0 0.0
        %439 = vmatprep.subr.mxu0 0.0
        %440 = vmatpush1.msra.mxu0 0.0
        %441 = vmatprep.subr.mxu0 0.0
        %442 = vmatpush1.msra.mxu0 0.0
        %443 = vmatprep.subr.mxu0 0.0
        %444 = vmatpush1.msra.mxu0 0.0
        %445 = vmatprep.subr.mxu0 0.0
        %446 = vmatpush1.msra.mxu0 0.0
        %447 = vmatprep.subr.mxu0 0.0
        %448 = vmatpush1.msra.mxu0 0.0
        %449 = vmatprep.subr.mxu0 0.0
        %450 = vmatpush1.msra.mxu0 0.0
        %451 = vmatprep.subr.mxu0 0.0
        %452 = vmatpush1.msra.mxu0 0.0
        %453 = vmatprep.subr.mxu0 0.0
        %454 = vmatpush1.msra.mxu0 0.0
        %455 = vmatprep.subr.mxu0 0.0
        %456 = vmatpush1.msra.mxu0 0.0
        %457 = vmatprep.subr.mxu0 0.0
        %458 = vmatpush1.msra.mxu0 0.0
        %459 = vmatprep.subr.mxu0 0.0
        %460 = vmatpush1.msra.mxu0 0.0
        %461 = vmatprep.subr.mxu0 0.0
        %462 = vmatpush1.msra.mxu0 0.0
        %463 = vmatprep.subr.mxu0 0.0
        %464 = vmatpush1.msra.mxu0 0.0
        %465 = vmatprep.subr.mxu0 0.0
        %466 = vmatpush1.msra.mxu0 0.0
        %467 = vmatprep.subr.mxu0 0.0
        %468 = vmatpush1.msra.mxu0 0.0
        %469 = vmatprep.mubr.f32.mxu0 0.0
        %470 = vmatmul.mubr.f32.gmra.mrb[0].mxu0 %v382
        %v471 = vpop.f32.mrb[0].mxu0
        %v472 = vadd.f32 %v378, %v471
        %v473 = vpop.f32.mrb[0].mxu0
        %474 = vmatprep.mubr.f32.mxu0 0.0
        %475 = vmatmul.mubr.f32.gmra.mrb[0].mxu0 %v385
        %v476 = vpop.f32.mrb[0].mxu0
        %v477 = vadd.f32 %v378, %v476
        %v478 = vpop.f32.mrb[0].mxu0
        %479 = vmatprep.mubr.f32.mxu0 0.0
        %480 = vmatmul.mubr.f32.gmra.mrb[0].mxu0 %v388
        %v481 = vpop.f32.mrb[0].mxu0
        %v482 = vadd.f32 %v378, %v481
        %v483 = vpop.f32.mrb[0].mxu0
        %484 = vmatprep.mubr.f32.mxu0 0.0
        %485 = vmatmul.mubr.f32.gmra.mrb[0].mxu0 %v391
        %v486 = vpop.f32.mrb[0].mxu0
        %v487 = vadd.f32 %v378, %v486
        %v488 = vpop.f32.mrb[0].mxu0
        %489 = vmatprep.mubr.f32.mxu0 0.0
        %490 = vmatmul.mubr.f32.gmra.mrb[0].mxu0 %v394
        %v491 = vpop.f32.mrb[0].mxu0
        %v492 = vadd.f32 %v378, %v491
        %v493 = vpop.f32.mrb[0].mxu0
        %494 = vmatprep.mubr.f32.mxu0 0.0
        %495 = vmatmul.mubr.f32.gmra.mrb[0].mxu0 %v397
        %v496 = vpop.f32.mrb[0].mxu0
        %v497 = vadd.f32 %v378, %v496
        %v498 = vpop.f32.mrb[0].mxu0
        %499 = vmatprep.mubr.f32.mxu0 0.0
        %500 = vmatmul.mubr.f32.gmra.mrb[0].mxu0 %v400
        %v501 = vpop.f32.mrb[0].mxu0
        %v502 = vadd.f32 %v378, %v501
        %v503 = vpop.f32.mrb[0].mxu0
        %504 = vmatprep.mubr.f32.mxu0 0.0
        %505 = vmatmul.mubr.f32.gmra.mrb[0].mxu0 %v403
        %v506 = vpop.f32.mrb[0].mxu0
        %v507 = vadd.f32 %v378, %v506
        %v508 = vpop.f32.mrb[0].mxu0
        %509 = vdwg.mxu0
        %510 = vst [vmem:[#allocation2] sm:$0xff] %v472
        %511 = vst [vmem:[#allocation2 + $0x8] sm:$0xff] %v477
        %512 = vst [vmem:[#allocation2 + $0x10] sm:$0xff] %v482
        %513 = vst [vmem:[#allocation2 + $0x18] sm:$0xff] %v487
        %514 = vst [vmem:[#allocation2 + $0x20] sm:$0xff] %v492
        %515 = vst [vmem:[#allocation2 + $0x28] sm:$0xff] %v497
        %516 = vst [vmem:[#allocation2 + $0x30] sm:$0xff] %v502
        %517 = vst [vmem:[#allocation2 + $0x38] sm:$0xff] %v507
      $region40: #{encoder_forward.1} parent=35 // pred_fallthru
        _
      %p518 = scmp.gt.s32.totalorder %s23, 0
      // Predicated region
      $region41: #{encoder_forward.1} parent=35 // pred_check
        %p519 = pneg %p518
      $region42: #{encoder_forward.1} parent=35 // pred_check_branch
        %521 = sbr.rel (%p519) target = $region44
      $region43: #{encoder_forward.1} parent=35 // pred_region
        %v522 = vld [vmem:[%s335] sm:$0xff]
        %v523 = vld [vmem:[%s335 + $0x8] sm:$0xff]
        %v524 = vld [vmem:[%s335 + $0x10] sm:$0xff]
        %v525 = vld [vmem:[%s335 + $0x18] sm:$0xff]
        %v526 = vld [vmem:[%s335 + $0x20] sm:$0xff]
        %v527 = vld [vmem:[%s335 + $0x28] sm:$0xff]
        %v528 = vld [vmem:[%s335 + $0x30] sm:$0xff]
        %v529 = vld [vmem:[%s335 + $0x38] sm:$0xff]
        %v530 = vld [vmem:[%s323] sm:$0xff]
        %v531 = vld [vmem:[%s323 + $0x8] sm:$0xff]
        %v532 = vld [vmem:[%s323 + $0x10] sm:$0xff]
        %v533 = vld [vmem:[%s323 + $0x18] sm:$0xff]
        %v535 = vlaneseq
        %v536 = vshrl.u32 %v535, 7
        %v537 = vsub.s32 0, %v536
        %v538 = vrot.slane %v354, %v537
        %vm540 = vcmask 261120
        %v542 = vsel %vm540, %v522, 0
        %v545 = vsel %vm540, %v523, 0
        %v548 = vsel %vm540, %v524, 0
        %v551 = vsel %vm540, %v525, 0
        %v554 = vsel %vm540, %v526, 0
        %v557 = vsel %vm540, %v527, 0
        %v560 = vsel %vm540, %v528, 0
        %v563 = vsel %vm540, %v529, 0
        %565 = vmatprep.subr.mxu0 0.0
        %566 = vmatpush1.msra.mxu0 %v530
        %567 = vmatprep.subr.mxu0 0.0
        %568 = vmatpush1.msra.mxu0 %v531
        %569 = vmatprep.subr.mxu0 0.0
        %570 = vmatpush1.msra.mxu0 %v532
        %571 = vmatprep.subr.mxu0 0.0
        %572 = vmatpush1.msra.mxu0 %v533
        %573 = vmatprep.subr.mxu0 0.0
        %574 = vmatpush1.msra.mxu0 0.0
        %575 = vmatprep.subr.mxu0 0.0
        %576 = vmatpush1.msra.mxu0 0.0
        %577 = vmatprep.subr.mxu0 0.0
        %578 = vmatpush1.msra.mxu0 0.0
        %579 = vmatprep.subr.mxu0 0.0
        %580 = vmatpush1.msra.mxu0 0.0
        %581 = vmatprep.subr.mxu0 0.0
        %582 = vmatpush1.msra.mxu0 0.0
        %583 = vmatprep.subr.mxu0 0.0
        %584 = vmatpush1.msra.mxu0 0.0
        %585 = vmatprep.subr.mxu0 0.0
        %586 = vmatpush1.msra.mxu0 0.0
        %587 = vmatprep.subr.mxu0 0.0
        %588 = vmatpush1.msra.mxu0 0.0
        %589 = vmatprep.subr.mxu0 0.0
        %590 = vmatpush1.msra.mxu0 0.0
        %591 = vmatprep.subr.mxu0 0.0
        %592 = vmatpush1.msra.mxu0 0.0
        %593 = vmatprep.subr.mxu0 0.0
        %594 = vmatpush1.msra.mxu0 0.0
        %595 = vmatprep.subr.mxu0 0.0
        %596 = vmatpush1.msra.mxu0 0.0
        %597 = vmatprep.subr.mxu0 0.0
        %598 = vmatpush1.msra.mxu0 0.0
        %599 = vmatprep.subr.mxu0 0.0
        %600 = vmatpush1.msra.mxu0 0.0
        %601 = vmatprep.subr.mxu0 0.0
        %602 = vmatpush1.msra.mxu0 0.0
        %603 = vmatprep.subr.mxu0 0.0
        %604 = vmatpush1.msra.mxu0 0.0
        %605 = vmatprep.subr.mxu0 0.0
        %606 = vmatpush1.msra.mxu0 0.0
        %607 = vmatprep.subr.mxu0 0.0
        %608 = vmatpush1.msra.mxu0 0.0
        %609 = vmatprep.subr.mxu0 0.0
        %610 = vmatpush1.msra.mxu0 0.0
        %611 = vmatprep.subr.mxu0 0.0
        %612 = vmatpush1.msra.mxu0 0.0
        %613 = vmatprep.subr.mxu0 0.0
        %614 = vmatpush1.msra.mxu0 0.0
        %615 = vmatprep.subr.mxu0 0.0
        %616 = vmatpush1.msra.mxu0 0.0
        %617 = vmatprep.subr.mxu0 0.0
        %618 = vmatpush1.msra.mxu0 0.0
        %619 = vmatprep.subr.mxu0 0.0
        %620 = vmatpush1.msra.mxu0 0.0
        %621 = vmatprep.subr.mxu0 0.0
        %622 = vmatpush1.msra.mxu0 0.0
        %623 = vmatprep.subr.mxu0 0.0
        %624 = vmatpush1.msra.mxu0 0.0
        %625 = vmatprep.subr.mxu0 0.0
        %626 = vmatpush1.msra.mxu0 0.0
        %627 = vmatprep.subr.mxu0 0.0
        %628 = vmatpush1.msra.mxu0 0.0
        %629 = vmatprep.mubr.f32.mxu0 0.0
        %630 = vmatmul.mubr.f32.gmra.mrb[0].mxu0 %v542
        %v631 = vpop.f32.mrb[0].mxu0
        %v632 = vadd.f32 %v538, %v631
        %v633 = vpop.f32.mrb[0].mxu0
        %634 = vmatprep.mubr.f32.mxu0 0.0
        %635 = vmatmul.mubr.f32.gmra.mrb[0].mxu0 %v545
        %v636 = vpop.f32.mrb[0].mxu0
        %v637 = vadd.f32 %v538, %v636
        %v638 = vpop.f32.mrb[0].mxu0
        %639 = vmatprep.mubr.f32.mxu0 0.0
        %640 = vmatmul.mubr.f32.gmra.mrb[0].mxu0 %v548
        %v641 = vpop.f32.mrb[0].mxu0
        %v642 = vadd.f32 %v538, %v641
        %v643 = vpop.f32.mrb[0].mxu0
        %644 = vmatprep.mubr.f32.mxu0 0.0
        %645 = vmatmul.mubr.f32.gmra.mrb[0].mxu0 %v551
        %v646 = vpop.f32.mrb[0].mxu0
        %v647 = vadd.f32 %v538, %v646
        %v648 = vpop.f32.mrb[0].mxu0
        %649 = vmatprep.mubr.f32.mxu0 0.0
        %650 = vmatmul.mubr.f32.gmra.mrb[0].mxu0 %v554
        %v651 = vpop.f32.mrb[0].mxu0
        %v652 = vadd.f32 %v538, %v651
        %v653 = vpop.f32.mrb[0].mxu0
        %654 = vmatprep.mubr.f32.mxu0 0.0
        %655 = vmatmul.mubr.f32.gmra.mrb[0].mxu0 %v557
        %v656 = vpop.f32.mrb[0].mxu0
        %v657 = vadd.f32 %v538, %v656
        %v658 = vpop.f32.mrb[0].mxu0
        %659 = vmatprep.mubr.f32.mxu0 0.0
        %660 = vmatmul.mubr.f32.gmra.mrb[0].mxu0 %v560
        %v661 = vpop.f32.mrb[0].mxu0
        %v662 = vadd.f32 %v538, %v661
        %v663 = vpop.f32.mrb[0].mxu0
        %664 = vmatprep.mubr.f32.mxu0 0.0
        %665 = vmatmul.mubr.f32.gmra.mrb[0].mxu0 %v563
        %v666 = vpop.f32.mrb[0].mxu0
        %v667 = vadd.f32 %v538, %v666
        %v668 = vpop.f32.mrb[0].mxu0
        %669 = vdwg.mxu0
        %670 = vst [vmem:[#allocation2] sm:$0xff] %v632
        %671 = vst [vmem:[#allocation2 + $0x8] sm:$0xff] %v637
        %672 = vst [vmem:[#allocation2 + $0x10] sm:$0xff] %v642
        %673 = vst [vmem:[#allocation2 + $0x18] sm:$0xff] %v647
        %674 = vst [vmem:[#allocation2 + $0x20] sm:$0xff] %v652
        %675 = vst [vmem:[#allocation2 + $0x28] sm:$0xff] %v657
        %676 = vst [vmem:[#allocation2 + $0x30] sm:$0xff] %v662
        %677 = vst [vmem:[#allocation2 + $0x38] sm:$0xff] %v667
      $region44: #{encoder_forward.1} parent=35 // pred_fallthru
        _
      %v678 = vld [vmem:[#allocation2] sm:$0xff]
      %vm679 = vcmask 261120
      %v681 = vsel %vm679, 0.0, 0
      %683 = vmatprep.subr.mxu0 0.0
      %684 = vmatpush1.msra.mxu0 %v350
      %685 = vmatprep.subr.mxu0 0.0
      %686 = vmatpush1.msra.mxu0 %v351
      %687 = vmatprep.subr.mxu0 0.0
      %688 = vmatpush1.msra.mxu0 %v352
      %689 = vmatprep.subr.mxu0 0.0
      %690 = vmatpush1.msra.mxu0 %v353
      %691 = vmatprep.subr.mxu0 0.0
      %692 = vmatpush1.msra.mxu0 0.0
      %693 = vmatprep.subr.mxu0 0.0
      %694 = vmatpush1.msra.mxu0 0.0
      %695 = vmatprep.subr.mxu0 0.0
      %696 = vmatpush1.msra.mxu0 0.0
      %697 = vmatprep.subr.mxu0 0.0
      %698 = vmatpush1.msra.mxu0 0.0
      %699 = vmatprep.subr.mxu0 0.0
      %700 = vmatpush1.msra.mxu0 0.0
      %701 = vmatprep.subr.mxu0 0.0
      %702 = vmatpush1.msra.mxu0 0.0
      %703 = vmatprep.subr.mxu0 0.0
      %704 = vmatpush1.msra.mxu0 0.0
      %705 = vmatprep.subr.mxu0 0.0
      %706 = vmatpush1.msra.mxu0 0.0
      %707 = vmatprep.subr.mxu0 0.0
      %708 = vmatpush1.msra.mxu0 0.0
      %709 = vmatprep.subr.mxu0 0.0
      %710 = vmatpush1.msra.mxu0 0.0
      %711 = vmatprep.subr.mxu0 0.0
      %712 = vmatpush1.msra.mxu0 0.0
      %713 = vmatprep.subr.mxu0 0.0
      %714 = vmatpush1.msra.mxu0 0.0
      %715 = vmatprep.subr.mxu0 0.0
      %716 = vmatpush1.msra.mxu0 0.0
      %717 = vmatprep.subr.mxu0 0.0
      %718 = vmatpush1.msra.mxu0 0.0
      %719 = vmatprep.subr.mxu0 0.0
      %720 = vmatpush1.msra.mxu0 0.0
      %721 = vmatprep.subr.mxu0 0.0
      %722 = vmatpush1.msra.mxu0 0.0
      %723 = vmatprep.subr.mxu0 0.0
      %724 = vmatpush1.msra.mxu0 0.0
      %725 = vmatprep.subr.mxu0 0.0
      %726 = vmatpush1.msra.mxu0 0.0
      %727 = vmatprep.subr.mxu0 0.0
      %728 = vmatpush1.msra.mxu0 0.0
      %729 = vmatprep.subr.mxu0 0.0
      %730 = vmatpush1.msra.mxu0 0.0
      %731 = vmatprep.subr.mxu0 0.0
      %732 = vmatpush1.msra.mxu0 0.0
      %733 = vmatprep.subr.mxu0 0.0
      %734 = vmatpush1.msra.mxu0 0.0
      %735 = vmatprep.subr.mxu0 0.0
      %736 = vmatpush1.msra.mxu0 0.0
      %737 = vmatprep.subr.mxu0 0.0
      %738 = vmatpush1.msra.mxu0 0.0
      %739 = vmatprep.subr.mxu0 0.0
      %740 = vmatpush1.msra.mxu0 0.0
      %741 = vmatprep.subr.mxu0 0.0
      %742 = vmatpush1.msra.mxu0 0.0
      %743 = vmatprep.subr.mxu0 0.0
      %744 = vmatpush1.msra.mxu0 0.0
      %745 = vmatprep.subr.mxu0 0.0
      %746 = vmatpush1.msra.mxu0 0.0
      %747 = vmatprep.mubr.f32.mxu0 0.0
      %748 = vmatmul.mubr.f32.gmra.mrb[0].mxu0 %v681
      %v749 = vpop.f32.mrb[0].mxu0
      %v750 = vadd.f32 0.0, %v749
      %v751 = vpop.f32.mrb[0].mxu0
      %752 = vdwg.mxu0
      %v753 = vadd.f32 %v678, %v750
      %v754 = vmul.f32 %v753, 0.5
      %v755 = vsel %vm359, %v753, %v754
      %v756 = vtanh.pop %v755
      %v757 = vmul.f32 %v756, 0.5
      %v758 = vadd.f32 %v757, 0.5
      %v759 = vsel %vm359, %v756, %v758
      %v760 = vmul.f32 %v759, 0.0
      %762 = vrot.lane.b32.xlu0 %v759, 64
      %v763 = vpop.permute.xlu0 %762
      %v765 = vmul.f32 %v759, %v763
      %767 = vrot.lane.b32.xlu0 %v765, 32
      %v768 = vpop.permute.xlu0 %767
      %v770 = vadd.f32 %v760, %v768
      %v771 = vtanh.pop %v770
      %773 = vrot.lane.b32.xlu0 %v771, 64
      %v774 = vpop.permute.xlu0 %773
      %v776 = vmul.f32 %v759, %v774
      %778 = vrot.lane.b32.xlu0 %v776, 32
      %v779 = vpop.permute.xlu0 %778
      %781 = vst.msk [vmem:[%s335] sm:$0xff] %vm679, %v779
      %s782 = scalar_lea.vmem [#allocation2], 8
      %v783 = vld [vmem:[%s782] sm:$0xff]
      %v784 = vsel %vm679, %v779, 0
      %786 = vmatprep.subr.mxu0 0.0
      %787 = vmatpush1.msra.mxu0 %v350
      %788 = vmatprep.subr.mxu0 0.0
      %789 = vmatpush1.msra.mxu0 %v351
      %790 = vmatprep.subr.mxu0 0.0
      %791 = vmatpush1.msra.mxu0 %v352
      %792 = vmatprep.subr.mxu0 0.0
      %793 = vmatpush1.msra.mxu0 %v353
      %794 = vmatprep.subr.mxu0 0.0
      %795 = vmatpush1.msra.mxu0 0.0
      %796 = vmatprep.subr.mxu0 0.0
      %797 = vmatpush1.msra.mxu0 0.0
      %798 = vmatprep.subr.mxu0 0.0
      %799 = vmatpush1.msra.mxu0 0.0
      %800 = vmatprep.subr.mxu0 0.0
      %801 = vmatpush1.msra.mxu0 0.0
      %802 = vmatprep.subr.mxu0 0.0
      %803 = vmatpush1.msra.mxu0 0.0
      %804 = vmatprep.subr.mxu0 0.0
      %805 = vmatpush1.msra.mxu0 0.0
      %806 = vmatprep.subr.mxu0 0.0
      %807 = vmatpush1.msra.mxu0 0.0
      %808 = vmatprep.subr.mxu0 0.0
      %809 = vmatpush1.msra.mxu0 0.0
      %810 = vmatprep.subr.mxu0 0.0
      %811 = vmatpush1.msra.mxu0 0.0
      %812 = vmatprep.subr.mxu0 0.0
      %813 = vmatpush1.msra.mxu0 0.0
      %814 = vmatprep.subr.mxu0 0.0
      %815 = vmatpush1.msra.mxu0 0.0
      %816 = vmatprep.subr.mxu0 0.0
      %817 = vmatpush1.msra.mxu0 0.0
      %818 = vmatprep.subr.mxu0 0.0
      %819 = vmatpush1.msra.mxu0 0.0
      %820 = vmatprep.subr.mxu0 0.0
      %821 = vmatpush1.msra.mxu0 0.0
      %822 = vmatprep.subr.mxu0 0.0
      %823 = vmatpush1.msra.mxu0 0.0
      %824 = vmatprep.subr.mxu0 0.0
      %825 = vmatpush1.msra.mxu0 0.0
      %826 = vmatprep.subr.mxu0 0.0
      %827 = vmatpush1.msra.mxu0 0.0
      %828 = vmatprep.subr.mxu0 0.0
      %829 = vmatpush1.msra.mxu0 0.0
      %830 = vmatprep.subr.mxu0 0.0
      %831 = vmatpush1.msra.mxu0 0.0
      %832 = vmatprep.subr.mxu0 0.0
      %833 = vmatpush1.msra.mxu0 0.0
      %834 = vmatprep.subr.mxu0 0.0
      %835 = vmatpush1.msra.mxu0 0.0
      %836 = vmatprep.subr.mxu0 0.0
      %837 = vmatpush1.msra.mxu0 0.0
      %838 = vmatprep.subr.mxu0 0.0
      %839 = vmatpush1.msra.mxu0 0.0
      %840 = vmatprep.subr.mxu0 0.0
      %841 = vmatpush1.msra.mxu0 0.0
      %842 = vmatprep.subr.mxu0 0.0
      %843 = vmatpush1.msra.mxu0 0.0
      %844 = vmatprep.subr.mxu0 0.0
      %845 = vmatpush1.msra.mxu0 0.0
      %846 = vmatprep.subr.mxu0 0.0
      %847 = vmatpush1.msra.mxu0 0.0
      %848 = vmatprep.subr.mxu0 0.0
      %849 = vmatpush1.msra.mxu0 0.0
      %850 = vmatprep.mubr.f32.mxu0 0.0
      %851 = vmatmul.mubr.f32.gmra.mrb[0].mxu0 %v784
      %v852 = vpop.f32.mrb[0].mxu0
      %v853 = vadd.f32 0.0, %v852
      %v854 = vpop.f32.mrb[0].mxu0
      %855 = vdwg.mxu0
      %v856 = vadd.f32 %v783, %v853
      %v857 = vmul.f32 %v856, 0.5
      %v858 = vsel %vm359, %v856, %v857
      %v859 = vtanh.pop %v858
      %v860 = vmul.f32 %v859, 0.5
      %v861 = vadd.f32 %v860, 0.5
      %v862 = vsel %vm359, %v859, %v861
      %v863 = vmul.f32 %v862, %v770
      %865 = vrot.lane.b32.xlu0 %v862, 64
      %v866 = vpop.permute.xlu0 %865
      %v868 = vmul.f32 %v862, %v866
      %870 = vrot.lane.b32.xlu0 %v868, 32
      %v871 = vpop.permute.xlu0 %870
      %v873 = vadd.f32 %v863, %v871
      %v874 = vtanh.pop %v873
      %876 = vrot.lane.b32.xlu0 %v874, 64
      %v877 = vpop.permute.xlu0 %876
      %v879 = vmul.f32 %v862, %v877
      %881 = vrot.lane.b32.xlu0 %v879, 32
      %v882 = vpop.permute.xlu0 %881
      %s884 = scalar_lea.vmem %s335, 8
      %885 = vst.msk [vmem:[%s884] sm:$0xff] %vm679, %v882
      %s886 = scalar_lea.vmem [#allocation2], 16
      %v887 = vld [vmem:[%s886] sm:$0xff]
      %v888 = vsel %vm679, %v882, 0
      %890 = vmatprep.subr.mxu0 0.0
      %891 = vmatpush1.msra.mxu0 %v350
      %892 = vmatprep.subr.mxu0 0.0
      %893 = vmatpush1.msra.mxu0 %v351
      %894 = vmatprep.subr.mxu0 0.0
      %895 = vmatpush1.msra.mxu0 %v352
      %896 = vmatprep.subr.mxu0 0.0
      %897 = vmatpush1.msra.mxu0 %v353
      %898 = vmatprep.subr.mxu0 0.0
      %899 = vmatpush1.msra.mxu0 0.0
      %900 = vmatprep.subr.mxu0 0.0
      %901 = vmatpush1.msra.mxu0 0.0
      %902 = vmatprep.subr.mxu0 0.0
      %903 = vmatpush1.msra.mxu0 0.0
      %904 = vmatprep.subr.mxu0 0.0
      %905 = vmatpush1.msra.mxu0 0.0
      %906 = vmatprep.subr.mxu0 0.0
      %907 = vmatpush1.msra.mxu0 0.0
      %908 = vmatprep.subr.mxu0 0.0
      %909 = vmatpush1.msra.mxu0 0.0
      %910 = vmatprep.subr.mxu0 0.0
      %911 = vmatpush1.msra.mxu0 0.0
      %912 = vmatprep.subr.mxu0 0.0
      %913 = vmatpush1.msra.mxu0 0.0
      %914 = vmatprep.subr.mxu0 0.0
      %915 = vmatpush1.msra.mxu0 0.0
      %916 = vmatprep.subr.mxu0 0.0
      %917 = vmatpush1.msra.mxu0 0.0
      %918 = vmatprep.subr.mxu0 0.0
      %919 = vmatpush1.msra.mxu0 0.0
      %920 = vmatprep.subr.mxu0 0.0
      %921 = vmatpush1.msra.mxu0 0.0
      %922 = vmatprep.subr.mxu0 0.0
      %923 = vmatpush1.msra.mxu0 0.0
      %924 = vmatprep.subr.mxu0 0.0
      %925 = vmatpush1.msra.mxu0 0.0
      %926 = vmatprep.subr.mxu0 0.0
      %927 = vmatpush1.msra.mxu0 0.0
      %928 = vmatprep.subr.mxu0 0.0
      %929 = vmatpush1.msra.mxu0 0.0
      %930 = vmatprep.subr.mxu0 0.0
      %931 = vmatpush1.msra.mxu0 0.0
      %932 = vmatprep.subr.mxu0 0.0
      %933 = vmatpush1.msra.mxu0 0.0
      %934 = vmatprep.subr.mxu0 0.0
      %935 = vmatpush1.msra.mxu0 0.0
      %936 = vmatprep.subr.mxu0 0.0
      %937 = vmatpush1.msra.mxu0 0.0
      %938 = vmatprep.subr.mxu0 0.0
      %939 = vmatpush1.msra.mxu0 0.0
      %940 = vmatprep.subr.mxu0 0.0
      %941 = vmatpush1.msra.mxu0 0.0
      %942 = vmatprep.subr.mxu0 0.0
      %943 = vmatpush1.msra.mxu0 0.0
      %944 = vmatprep.subr.mxu0 0.0
      %945 = vmatpush1.msra.mxu0 0.0
      %946 = vmatprep.subr.mxu0 0.0
      %947 = vmatpush1.msra.mxu0 0.0
      %948 = vmatprep.subr.mxu0 0.0
      %949 = vmatpush1.msra.mxu0 0.0
      %950 = vmatprep.subr.mxu0 0.0
      %951 = vmatpush1.msra.mxu0 0.0
      %952 = vmatprep.subr.mxu0 0.0
      %953 = vmatpush1.msra.mxu0 0.0
      %954 = vmatprep.mubr.f32.mxu0 0.0
      %955 = vmatmul.mubr.f32.gmra.mrb[0].mxu0 %v888
      %v956 = vpop.f32.mrb[0].mxu0
      %v957 = vadd.f32 0.0, %v956
      %v958 = vpop.f32.mrb[0].mxu0
      %959 = vdwg.mxu0
      %v960 = vadd.f32 %v887, %v957
      %v961 = vmul.f32 %v960, 0.5
      %v962 = vsel %vm359, %v960, %v961
      %v963 = vtanh.pop %v962
      %v964 = vmul.f32 %v963, 0.5
      %v965 = vadd.f32 %v964, 0.5
      %v966 = vsel %vm359, %v963, %v965
      %v967 = vmul.f32 %v966, %v873
      %969 = vrot.lane.b32.xlu0 %v966, 64
      %v970 = vpop.permute.xlu0 %969
      %v972 = vmul.f32 %v966, %v970
      %974 = vrot.lane.b32.xlu0 %v972, 32
      %v975 = vpop.permute.xlu0 %974
      %v977 = vadd.f32 %v967, %v975
      %v978 = vtanh.pop %v977
      %980 = vrot.lane.b32.xlu0 %v978, 64
      %v981 = vpop.permute.xlu0 %980
      %v983 = vmul.f32 %v966, %v981
      %985 = vrot.lane.b32.xlu0 %v983, 32
      %v986 = vpop.permute.xlu0 %985
      %s988 = scalar_lea.vmem %s335, 16
      %989 = vst.msk [vmem:[%s988] sm:$0xff] %vm679, %v986
      %s990 = scalar_lea.vmem [#allocation2], 24
      %v991 = vld [vmem:[%s990] sm:$0xff]
      %v992 = vsel %vm679, %v986, 0
      %994 = vmatprep.subr.mxu0 0.0
      %995 = vmatpush1.msra.mxu0 %v350
      %996 = vmatprep.subr.mxu0 0.0
      %997 = vmatpush1.msra.mxu0 %v351
      %998 = vmatprep.subr.mxu0 0.0
      %999 = vmatpush1.msra.mxu0 %v352
      %1000 = vmatprep.subr.mxu0 0.0
      %1001 = vmatpush1.msra.mxu0 %v353
      %1002 = vmatprep.subr.mxu0 0.0
      %1003 = vmatpush1.msra.mxu0 0.0
      %1004 = vmatprep.subr.mxu0 0.0
      %1005 = vmatpush1.msra.mxu0 0.0
      %1006 = vmatprep.subr.mxu0 0.0
      %1007 = vmatpush1.msra.mxu0 0.0
      %1008 = vmatprep.subr.mxu0 0.0
      %1009 = vmatpush1.msra.mxu0 0.0
      %1010 = vmatprep.subr.mxu0 0.0
      %1011 = vmatpush1.msra.mxu0 0.0
      %1012 = vmatprep.subr.mxu0 0.0
      %1013 = vmatpush1.msra.mxu0 0.0
      %1014 = vmatprep.subr.mxu0 0.0
      %1015 = vmatpush1.msra.mxu0 0.0
      %1016 = vmatprep.subr.mxu0 0.0
      %1017 = vmatpush1.msra.mxu0 0.0
      %1018 = vmatprep.subr.mxu0 0.0
      %1019 = vmatpush1.msra.mxu0 0.0
      %1020 = vmatprep.subr.mxu0 0.0
      %1021 = vmatpush1.msra.mxu0 0.0
      %1022 = vmatprep.subr.mxu0 0.0
      %1023 = vmatpush1.msra.mxu0 0.0
      %1024 = vmatprep.subr.mxu0 0.0
      %1025 = vmatpush1.msra.mxu0 0.0
      %1026 = vmatprep.subr.mxu0 0.0
      %1027 = vmatpush1.msra.mxu0 0.0
      %1028 = vmatprep.subr.mxu0 0.0
      %1029 = vmatpush1.msra.mxu0 0.0
      %1030 = vmatprep.subr.mxu0 0.0
      %1031 = vmatpush1.msra.mxu0 0.0
      %1032 = vmatprep.subr.mxu0 0.0
      %1033 = vmatpush1.msra.mxu0 0.0
      %1034 = vmatprep.subr.mxu0 0.0
      %1035 = vmatpush1.msra.mxu0 0.0
      %1036 = vmatprep.subr.mxu0 0.0
      %1037 = vmatpush1.msra.mxu0 0.0
      %1038 = vmatprep.subr.mxu0 0.0
      %1039 = vmatpush1.msra.mxu0 0.0
      %1040 = vmatprep.subr.mxu0 0.0
      %1041 = vmatpush1.msra.mxu0 0.0
      %1042 = vmatprep.subr.mxu0 0.0
      %1043 = vmatpush1.msra.mxu0 0.0
      %1044 = vmatprep.subr.mxu0 0.0
      %1045 = vmatpush1.msra.mxu0 0.0
      %1046 = vmatprep.subr.mxu0 0.0
      %1047 = vmatpush1.msra.mxu0 0.0
      %1048 = vmatprep.subr.mxu0 0.0
      %1049 = vmatpush1.msra.mxu0 0.0
      %1050 = vmatprep.subr.mxu0 0.0
      %1051 = vmatpush1.msra.mxu0 0.0
      %1052 = vmatprep.subr.mxu0 0.0
      %1053 = vmatpush1.msra.mxu0 0.0
      %1054 = vmatprep.subr.mxu0 0.0
      %1055 = vmatpush1.msra.mxu0 0.0
      %1056 = vmatprep.subr.mxu0 0.0
      %1057 = vmatpush1.msra.mxu0 0.0
      %1058 = vmatprep.mubr.f32.mxu0 0.0
      %1059 = vmatmul.mubr.f32.gmra.mrb[0].mxu0 %v992
      %v1060 = vpop.f32.mrb[0].mxu0
      %v1061 = vadd.f32 0.0, %v1060
      %v1062 = vpop.f32.mrb[0].mxu0
      %1063 = vdwg.mxu0
      %v1064 = vadd.f32 %v991, %v1061
      %v1065 = vmul.f32 %v1064, 0.5
      %v1066 = vsel %vm359, %v1064, %v1065
      %v1067 = vtanh.pop %v1066
      %v1068 = vmul.f32 %v1067, 0.5
      %v1069 = vadd.f32 %v1068, 0.5
      %v1070 = vsel %vm359, %v1067, %v1069
      %v1071 = vmul.f32 %v1070, %v977
      %1073 = vrot.lane.b32.xlu0 %v1070, 64
      %v1074 = vpop.permute.xlu0 %1073
      %v1076 = vmul.f32 %v1070, %v1074
      %1078 = vrot.lane.b32.xlu0 %v1076, 32
      %v1079 = vpop.permute.xlu0 %1078
      %v1081 = vadd.f32 %v1071, %v1079
      %v1082 = vtanh.pop %v1081
      %1084 = vrot.lane.b32.xlu0 %v1082, 64
      %v1085 = vpop.permute.xlu0 %1084
      %v1087 = vmul.f32 %v1070, %v1085
      %1089 = vrot.lane.b32.xlu0 %v1087, 32
      %v1090 = vpop.permute.xlu0 %1089
      %s1092 = scalar_lea.vmem %s335, 24
      %1093 = vst.msk [vmem:[%s1092] sm:$0xff] %vm679, %v1090
      %s1094 = scalar_lea.vmem [#allocation2], 32
      %v1095 = vld [vmem:[%s1094] sm:$0xff]
      %v1096 = vsel %vm679, %v1090, 0
      %1098 = vmatprep.subr.mxu0 0.0
      %1099 = vmatpush1.msra.mxu0 %v350
      %1100 = vmatprep.subr.mxu0 0.0
      %1101 = vmatpush1.msra.mxu0 %v351
      %1102 = vmatprep.subr.mxu0 0.0
      %1103 = vmatpush1.msra.mxu0 %v352
      %1104 = vmatprep.subr.mxu0 0.0
      %1105 = vmatpush1.msra.mxu0 %v353
      %1106 = vmatprep.subr.mxu0 0.0
      %1107 = vmatpush1.msra.mxu0 0.0
      %1108 = vmatprep.subr.mxu0 0.0
      %1109 = vmatpush1.msra.mxu0 0.0
      %1110 = vmatprep.subr.mxu0 0.0
      %1111 = vmatpush1.msra.mxu0 0.0
      %1112 = vmatprep.subr.mxu0 0.0
      %1113 = vmatpush1.msra.mxu0 0.0
      %1114 = vmatprep.subr.mxu0 0.0
      %1115 = vmatpush1.msra.mxu0 0.0
      %1116 = vmatprep.subr.mxu0 0.0
      %1117 = vmatpush1.msra.mxu0 0.0
      %1118 = vmatprep.subr.mxu0 0.0
      %1119 = vmatpush1.msra.mxu0 0.0
      %1120 = vmatprep.subr.mxu0 0.0
      %1121 = vmatpush1.msra.mxu0 0.0
      %1122 = vmatprep.subr.mxu0 0.0
      %1123 = vmatpush1.msra.mxu0 0.0
      %1124 = vmatprep.subr.mxu0 0.0
      %1125 = vmatpush1.msra.mxu0 0.0
      %1126 = vmatprep.subr.mxu0 0.0
      %1127 = vmatpush1.msra.mxu0 0.0
      %1128 = vmatprep.subr.mxu0 0.0
      %1129 = vmatpush1.msra.mxu0 0.0
      %1130 = vmatprep.subr.mxu0 0.0
      %1131 = vmatpush1.msra.mxu0 0.0
      %1132 = vmatprep.subr.mxu0 0.0
      %1133 = vmatpush1.msra.mxu0 0.0
      %1134 = vmatprep.subr.mxu0 0.0
      %1135 = vmatpush1.msra.mxu0 0.0
      %1136 = vmatprep.subr.mxu0 0.0
      %1137 = vmatpush1.msra.mxu0 0.0
      %1138 = vmatprep.subr.mxu0 0.0
      %1139 = vmatpush1.msra.mxu0 0.0
      %1140 = vmatprep.subr.mxu0 0.0
      %1141 = vmatpush1.msra.mxu0 0.0
      %1142 = vmatprep.subr.mxu0 0.0
      %1143 = vmatpush1.msra.mxu0 0.0
      %1144 = vmatprep.subr.mxu0 0.0
      %1145 = vmatpush1.msra.mxu0 0.0
      %1146 = vmatprep.subr.mxu0 0.0
      %1147 = vmatpush1.msra.mxu0 0.0
      %1148 = vmatprep.subr.mxu0 0.0
      %1149 = vmatpush1.msra.mxu0 0.0
      %1150 = vmatprep.subr.mxu0 0.0
      %1151 = vmatpush1.msra.mxu0 0.0
      %1152 = vmatprep.subr.mxu0 0.0
      %1153 = vmatpush1.msra.mxu0 0.0
      %1154 = vmatprep.subr.mxu0 0.0
      %1155 = vmatpush1.msra.mxu0 0.0
      %1156 = vmatprep.subr.mxu0 0.0
      %1157 = vmatpush1.msra.mxu0 0.0
      %1158 = vmatprep.subr.mxu0 0.0
      %1159 = vmatpush1.msra.mxu0 0.0
      %1160 = vmatprep.subr.mxu0 0.0
      %1161 = vmatpush1.msra.mxu0 0.0
      %1162 = vmatprep.mubr.f32.mxu0 0.0
      %1163 = vmatmul.mubr.f32.gmra.mrb[0].mxu0 %v1096
      %v1164 = vpop.f32.mrb[0].mxu0
      %v1165 = vadd.f32 0.0, %v1164
      %v1166 = vpop.f32.mrb[0].mxu0
      %1167 = vdwg.mxu0
      %v1168 = vadd.f32 %v1095, %v1165
      %v1169 = vmul.f32 %v1168, 0.5
      %v1170 = vsel %vm359, %v1168, %v1169
      %v1171 = vtanh.pop %v1170
      %v1172 = vmul.f32 %v1171, 0.5
      %v1173 = vadd.f32 %v1172, 0.5
      %v1174 = vsel %vm359, %v1171, %v1173
      %v1175 = vmul.f32 %v1174, %v1081
      %1177 = vrot.lane.b32.xlu0 %v1174, 64
      %v1178 = vpop.permute.xlu0 %1177
      %v1180 = vmul.f32 %v1174, %v1178
      %1182 = vrot.lane.b32.xlu0 %v1180, 32
      %v1183 = vpop.permute.xlu0 %1182
      %v1185 = vadd.f32 %v1175, %v1183
      %v1186 = vtanh.pop %v1185
      %1188 = vrot.lane.b32.xlu0 %v1186, 64
      %v1189 = vpop.permute.xlu0 %1188
      %v1191 = vmul.f32 %v1174, %v1189
      %1193 = vrot.lane.b32.xlu0 %v1191, 32
      %v1194 = vpop.permute.xlu0 %1193
      %s1196 = scalar_lea.vmem %s335, 32
      %1197 = vst.msk [vmem:[%s1196] sm:$0xff] %vm679, %v1194
      %s1198 = scalar_lea.vmem [#allocation2], 40
      %v1199 = vld [vmem:[%s1198] sm:$0xff]
      %v1200 = vsel %vm679, %v1194, 0
      %1202 = vmatprep.subr.mxu0 0.0
      %1203 = vmatpush1.msra.mxu0 %v350
      %1204 = vmatprep.subr.mxu0 0.0
      %1205 = vmatpush1.msra.mxu0 %v351
      %1206 = vmatprep.subr.mxu0 0.0
      %1207 = vmatpush1.msra.mxu0 %v352
      %1208 = vmatprep.subr.mxu0 0.0
      %1209 = vmatpush1.msra.mxu0 %v353
      %1210 = vmatprep.subr.mxu0 0.0
      %1211 = vmatpush1.msra.mxu0 0.0
      %1212 = vmatprep.subr.mxu0 0.0
      %1213 = vmatpush1.msra.mxu0 0.0
      %1214 = vmatprep.subr.mxu0 0.0
      %1215 = vmatpush1.msra.mxu0 0.0
      %1216 = vmatprep.subr.mxu0 0.0
      %1217 = vmatpush1.msra.mxu0 0.0
      %1218 = vmatprep.subr.mxu0 0.0
      %1219 = vmatpush1.msra.mxu0 0.0
      %1220 = vmatprep.subr.mxu0 0.0
      %1221 = vmatpush1.msra.mxu0 0.0
      %1222 = vmatprep.subr.mxu0 0.0
      %1223 = vmatpush1.msra.mxu0 0.0
      %1224 = vmatprep.subr.mxu0 0.0
      %1225 = vmatpush1.msra.mxu0 0.0
      %1226 = vmatprep.subr.mxu0 0.0
      %1227 = vmatpush1.msra.mxu0 0.0
      %1228 = vmatprep.subr.mxu0 0.0
      %1229 = vmatpush1.msra.mxu0 0.0
      %1230 = vmatprep.subr.mxu0 0.0
      %1231 = vmatpush1.msra.mxu0 0.0
      %1232 = vmatprep.subr.mxu0 0.0
      %1233 = vmatpush1.msra.mxu0 0.0
      %1234 = vmatprep.subr.mxu0 0.0
      %1235 = vmatpush1.msra.mxu0 0.0
      %1236 = vmatprep.subr.mxu0 0.0
      %1237 = vmatpush1.msra.mxu0 0.0
      %1238 = vmatprep.subr.mxu0 0.0
      %1239 = vmatpush1.msra.mxu0 0.0
      %1240 = vmatprep.subr.mxu0 0.0
      %1241 = vmatpush1.msra.mxu0 0.0
      %1242 = vmatprep.subr.mxu0 0.0
      %1243 = vmatpush1.msra.mxu0 0.0
      %1244 = vmatprep.subr.mxu0 0.0
      %1245 = vmatpush1.msra.mxu0 0.0
      %1246 = vmatprep.subr.mxu0 0.0
      %1247 = vmatpush1.msra.mxu0 0.0
      %1248 = vmatprep.subr.mxu0 0.0
      %1249 = vmatpush1.msra.mxu0 0.0
      %1250 = vmatprep.subr.mxu0 0.0
      %1251 = vmatpush1.msra.mxu0 0.0
      %1252 = vmatprep.subr.mxu0 0.0
      %1253 = vmatpush1.msra.mxu0 0.0
      %1254 = vmatprep.subr.mxu0 0.0
      %1255 = vmatpush1.msra.mxu0 0.0
      %1256 = vmatprep.subr.mxu0 0.0
      %1257 = vmatpush1.msra.mxu0 0.0
      %1258 = vmatprep.subr.mxu0 0.0
      %1259 = vmatpush1.msra.mxu0 0.0
      %1260 = vmatprep.subr.mxu0 0.0
      %1261 = vmatpush1.msra.mxu0 0.0
      %1262 = vmatprep.subr.mxu0 0.0
      %1263 = vmatpush1.msra.mxu0 0.0
      %1264 = vmatprep.subr.mxu0 0.0
      %1265 = vmatpush1.msra.mxu0 0.0
      %1266 = vmatprep.mubr.f32.mxu0 0.0
      %1267 = vmatmul.mubr.f32.gmra.mrb[0].mxu0 %v1200
      %v1268 = vpop.f32.mrb[0].mxu0
      %v1269 = vadd.f32 0.0, %v1268
      %v1270 = vpop.f32.mrb[0].mxu0
      %1271 = vdwg.mxu0
      %v1272 = vadd.f32 %v1199, %v1269
      %v1273 = vmul.f32 %v1272, 0.5
      %v1274 = vsel %vm359, %v1272, %v1273
      %v1275 = vtanh.pop %v1274
      %v1276 = vmul.f32 %v1275, 0.5
      %v1277 = vadd.f32 %v1276, 0.5
      %v1278 = vsel %vm359, %v1275, %v1277
      %v1279 = vmul.f32 %v1278, %v1185
      %1281 = vrot.lane.b32.xlu0 %v1278, 64
      %v1282 = vpop.permute.xlu0 %1281
      %v1284 = vmul.f32 %v1278, %v1282
      %1286 = vrot.lane.b32.xlu0 %v1284, 32
      %v1287 = vpop.permute.xlu0 %1286
      %v1289 = vadd.f32 %v1279, %v1287
      %v1290 = vtanh.pop %v1289
      %1292 = vrot.lane.b32.xlu0 %v1290, 64
      %v1293 = vpop.permute.xlu0 %1292
      %v1295 = vmul.f32 %v1278, %v1293
      %1297 = vrot.lane.b32.xlu0 %v1295, 32
      %v1298 = vpop.permute.xlu0 %1297
      %s1300 = scalar_lea.vmem %s335, 40
      %1301 = vst.msk [vmem:[%s1300] sm:$0xff] %vm679, %v1298
      %s1302 = scalar_lea.vmem [#allocation2], 48
      %v1303 = vld [vmem:[%s1302] sm:$0xff]
      %v1304 = vsel %vm679, %v1298, 0
      %1306 = vmatprep.subr.mxu0 0.0
      %1307 = vmatpush1.msra.mxu0 %v350
      %1308 = vmatprep.subr.mxu0 0.0
      %1309 = vmatpush1.msra.mxu0 %v351
      %1310 = vmatprep.subr.mxu0 0.0
      %1311 = vmatpush1.msra.mxu0 %v352
      %1312 = vmatprep.subr.mxu0 0.0
      %1313 = vmatpush1.msra.mxu0 %v353
      %1314 = vmatprep.subr.mxu0 0.0
      %1315 = vmatpush1.msra.mxu0 0.0
      %1316 = vmatprep.subr.mxu0 0.0
      %1317 = vmatpush1.msra.mxu0 0.0
      %1318 = vmatprep.subr.mxu0 0.0
      %1319 = vmatpush1.msra.mxu0 0.0
      %1320 = vmatprep.subr.mxu0 0.0
      %1321 = vmatpush1.msra.mxu0 0.0
      %1322 = vmatprep.subr.mxu0 0.0
      %1323 = vmatpush1.msra.mxu0 0.0
      %1324 = vmatprep.subr.mxu0 0.0
      %1325 = vmatpush1.msra.mxu0 0.0
      %1326 = vmatprep.subr.mxu0 0.0
      %1327 = vmatpush1.msra.mxu0 0.0
      %1328 = vmatprep.subr.mxu0 0.0
      %1329 = vmatpush1.msra.mxu0 0.0
      %1330 = vmatprep.subr.mxu0 0.0
      %1331 = vmatpush1.msra.mxu0 0.0
      %1332 = vmatprep.subr.mxu0 0.0
      %1333 = vmatpush1.msra.mxu0 0.0
      %1334 = vmatprep.subr.mxu0 0.0
      %1335 = vmatpush1.msra.mxu0 0.0
      %1336 = vmatprep.subr.mxu0 0.0
      %1337 = vmatpush1.msra.mxu0 0.0
      %1338 = vmatprep.subr.mxu0 0.0
      %1339 = vmatpush1.msra.mxu0 0.0
      %1340 = vmatprep.subr.mxu0 0.0
      %1341 = vmatpush1.msra.mxu0 0.0
      %1342 = vmatprep.subr.mxu0 0.0
      %1343 = vmatpush1.msra.mxu0 0.0
      %1344 = vmatprep.subr.mxu0 0.0
      %1345 = vmatpush1.msra.mxu0 0.0
      %1346 = vmatprep.subr.mxu0 0.0
      %1347 = vmatpush1.msra.mxu0 0.0
      %1348 = vmatprep.subr.mxu0 0.0
      %1349 = vmatpush1.msra.mxu0 0.0
      %1350 = vmatprep.subr.mxu0 0.0
      %1351 = vmatpush1.msra.mxu0 0.0
      %1352 = vmatprep.subr.mxu0 0.0
      %1353 = vmatpush1.msra.mxu0 0.0
      %1354 = vmatprep.subr.mxu0 0.0
      %1355 = vmatpush1.msra.mxu0 0.0
      %1356 = vmatprep.subr.mxu0 0.0
      %1357 = vmatpush1.msra.mxu0 0.0
      %1358 = vmatprep.subr.mxu0 0.0
      %1359 = vmatpush1.msra.mxu0 0.0
      %1360 = vmatprep.subr.mxu0 0.0
      %1361 = vmatpush1.msra.mxu0 0.0
      %1362 = vmatprep.subr.mxu0 0.0
      %1363 = vmatpush1.msra.mxu0 0.0
      %1364 = vmatprep.subr.mxu0 0.0
      %1365 = vmatpush1.msra.mxu0 0.0
      %1366 = vmatprep.subr.mxu0 0.0
      %1367 = vmatpush1.msra.mxu0 0.0
      %1368 = vmatprep.subr.mxu0 0.0
      %1369 = vmatpush1.msra.mxu0 0.0
      %1370 = vmatprep.mubr.f32.mxu0 0.0
      %1371 = vmatmul.mubr.f32.gmra.mrb[0].mxu0 %v1304
      %v1372 = vpop.f32.mrb[0].mxu0
      %v1373 = vadd.f32 0.0, %v1372
      %v1374 = vpop.f32.mrb[0].mxu0
      %1375 = vdwg.mxu0
      %v1376 = vadd.f32 %v1303, %v1373
      %v1377 = vmul.f32 %v1376, 0.5
      %v1378 = vsel %vm359, %v1376, %v1377
      %v1379 = vtanh.pop %v1378
      %v1380 = vmul.f32 %v1379, 0.5
      %v1381 = vadd.f32 %v1380, 0.5
      %v1382 = vsel %vm359, %v1379, %v1381
      %v1383 = vmul.f32 %v1382, %v1289
      %1385 = vrot.lane.b32.xlu0 %v1382, 64
      %v1386 = vpop.permute.xlu0 %1385
      %v1388 = vmul.f32 %v1382, %v1386
      %1390 = vrot.lane.b32.xlu0 %v1388, 32
      %v1391 = vpop.permute.xlu0 %1390
      %v1393 = vadd.f32 %v1383, %v1391
      %v1394 = vtanh.pop %v1393
      %1396 = vrot.lane.b32.xlu0 %v1394, 64
      %v1397 = vpop.permute.xlu0 %1396
      %v1399 = vmul.f32 %v1382, %v1397
      %1401 = vrot.lane.b32.xlu0 %v1399, 32
      %v1402 = vpop.permute.xlu0 %1401
      %s1404 = scalar_lea.vmem %s335, 48
      %1405 = vst.msk [vmem:[%s1404] sm:$0xff] %vm679, %v1402
      %s1406 = scalar_lea.vmem [#allocation2], 56
      %v1407 = vld [vmem:[%s1406] sm:$0xff]
      %v1408 = vsel %vm679, %v1402, 0
      %1410 = vmatprep.subr.mxu0 0.0
      %1411 = vmatpush1.msra.mxu0 %v350
      %1412 = vmatprep.subr.mxu0 0.0
      %1413 = vmatpush1.msra.mxu0 %v351
      %1414 = vmatprep.subr.mxu0 0.0
      %1415 = vmatpush1.msra.mxu0 %v352
      %1416 = vmatprep.subr.mxu0 0.0
      %1417 = vmatpush1.msra.mxu0 %v353
      %1418 = vmatprep.subr.mxu0 0.0
      %1419 = vmatpush1.msra.mxu0 0.0
      %1420 = vmatprep.subr.mxu0 0.0
      %1421 = vmatpush1.msra.mxu0 0.0
      %1422 = vmatprep.subr.mxu0 0.0
      %1423 = vmatpush1.msra.mxu0 0.0
      %1424 = vmatprep.subr.mxu0 0.0
      %1425 = vmatpush1.msra.mxu0 0.0
      %1426 = vmatprep.subr.mxu0 0.0
      %1427 = vmatpush1.msra.mxu0 0.0
      %1428 = vmatprep.subr.mxu0 0.0
      %1429 = vmatpush1.msra.mxu0 0.0
      %1430 = vmatprep.subr.mxu0 0.0
      %1431 = vmatpush1.msra.mxu0 0.0
      %1432 = vmatprep.subr.mxu0 0.0
      %1433 = vmatpush1.msra.mxu0 0.0
      %1434 = vmatprep.subr.mxu0 0.0
      %1435 = vmatpush1.msra.mxu0 0.0
      %1436 = vmatprep.subr.mxu0 0.0
      %1437 = vmatpush1.msra.mxu0 0.0
      %1438 = vmatprep.subr.mxu0 0.0
      %1439 = vmatpush1.msra.mxu0 0.0
      %1440 = vmatprep.subr.mxu0 0.0
      %1441 = vmatpush1.msra.mxu0 0.0
      %1442 = vmatprep.subr.mxu0 0.0
      %1443 = vmatpush1.msra.mxu0 0.0
      %1444 = vmatprep.subr.mxu0 0.0
      %1445 = vmatpush1.msra.mxu0 0.0
      %1446 = vmatprep.subr.mxu0 0.0
      %1447 = vmatpush1.msra.mxu0 0.0
      %1448 = vmatprep.subr.mxu0 0.0
      %1449 = vmatpush1.msra.mxu0 0.0
      %1450 = vmatprep.subr.mxu0 0.0
      %1451 = vmatpush1.msra.mxu0 0.0
      %1452 = vmatprep.subr.mxu0 0.0
      %1453 = vmatpush1.msra.mxu0 0.0
      %1454 = vmatprep.subr.mxu0 0.0
      %1455 = vmatpush1.msra.mxu0 0.0
      %1456 = vmatprep.subr.mxu0 0.0
      %1457 = vmatpush1.msra.mxu0 0.0
      %1458 = vmatprep.subr.mxu0 0.0
      %1459 = vmatpush1.msra.mxu0 0.0
      %1460 = vmatprep.subr.mxu0 0.0
      %1461 = vmatpush1.msra.mxu0 0.0
      %1462 = vmatprep.subr.mxu0 0.0
      %1463 = vmatpush1.msra.mxu0 0.0
      %1464 = vmatprep.subr.mxu0 0.0
      %1465 = vmatpush1.msra.mxu0 0.0
      %1466 = vmatprep.subr.mxu0 0.0
      %1467 = vmatpush1.msra.mxu0 0.0
      %1468 = vmatprep.subr.mxu0 0.0
      %1469 = vmatpush1.msra.mxu0 0.0
      %1470 = vmatprep.subr.mxu0 0.0
      %1471 = vmatpush1.msra.mxu0 0.0
      %1472 = vmatprep.subr.mxu0 0.0
      %1473 = vmatpush1.msra.mxu0 0.0
      %1474 = vmatprep.mubr.f32.mxu0 0.0
      %1475 = vmatmul.mubr.f32.gmra.mrb[0].mxu0 %v1408
      %v1476 = vpop.f32.mrb[0].mxu0
      %v1477 = vadd.f32 0.0, %v1476
      %v1478 = vpop.f32.mrb[0].mxu0
      %1479 = vdwg.mxu0
      %v1480 = vadd.f32 %v1407, %v1477
      %v1481 = vmul.f32 %v1480, 0.5
      %v1482 = vsel %vm359, %v1480, %v1481
      %v1483 = vtanh.pop %v1482
      %v1484 = vmul.f32 %v1483, 0.5
      %v1485 = vadd.f32 %v1484, 0.5
      %v1486 = vsel %vm359, %v1483, %v1485
      %v1487 = vmul.f32 %v1486, %v1393
      %1489 = vrot.lane.b32.xlu0 %v1486, 64
      %v1490 = vpop.permute.xlu0 %1489
      %v1492 = vmul.f32 %v1486, %v1490
      %1494 = vrot.lane.b32.xlu0 %v1492, 32
      %v1495 = vpop.permute.xlu0 %1494
      %v1497 = vadd.f32 %v1487, %v1495
      %v1498 = vtanh.pop %v1497
      %1500 = vrot.lane.b32.xlu0 %v1498, 64
      %v1501 = vpop.permute.xlu0 %1500
      %v1503 = vmul.f32 %v1486, %v1501
      %1505 = vrot.lane.b32.xlu0 %v1503, 32
      %v1506 = vpop.permute.xlu0 %1505
      %s1508 = scalar_lea.vmem %s335, 56
      %1509 = vst.msk [vmem:[%s1508] sm:$0xff] %vm679, %v1506
      %1510 = vst.msk [vmem:[%s342] sm:$0xff] %vm679, %v1506
      %1512 = vrot.lane.b32.xlu0 %v1497, 96
      %v1513 = vpop.permute.xlu0 %1512
      %1515 = vst.msk [vmem:[%s349] sm:$0xff] %vm679, %v1513
      %p1516 = scmp.lt.s32.totalorder %s22, 0
      %s1517 = scalar_select %p1516, %s22, 0
      %s1518 = smul.addr %s1517, 8
      %s1519 = scalar_lea.vmem %s4, %s1518
      %p1520 = scmp.lt.s32.totalorder %s23, 1
      %s1521 = scalar_select %p1520, %s23, 1
      %p1522 = scmp.lt.s32.totalorder %s22, 0
      %s1523 = scalar_select %p1522, %s22, 0
      %s1524 = sadd.s32 %s1523, %s1521
      %s1525 = smul.addr %s1524, 8
      %s1526 = scalar_lea.vmem %s5, %s1525
      %p1527 = scmp.lt.s32.totalorder %s23, 1
      %s1528 = scalar_select %p1527, %s23, 1
      %p1529 = scmp.lt.s32.totalorder %s22, 0
      %s1530 = scalar_select %p1529, %s22, 0
      %s1531 = sadd.s32 %s1530, %s1528
      %s1532 = smul.addr %s1531, 8
      %s1533 = scalar_lea.vmem %s6, %s1532
      // Predicated region
      $region45: #{encoder_forward.1} parent=35 // pred_check
        %p1534 = pneg %p152
      $region46: #{encoder_forward.1} parent=35 // pred_check_branch
        %1536 = sbr.rel (%p1534) target = $region48
      $region47: #{encoder_forward.1} parent=35 // pred_region
        _
      $region48: #{encoder_forward.1} parent=35 // pred_fallthru
        _
      // Predicated region
      $region49: #{encoder_forward.1} parent=35 // pred_check
        %p1537 = pneg %p180
      $region50: #{encoder_forward.1} parent=35 // pred_check_branch
        %1539 = sbr.rel (%p1537) target = $region52
      $region51: #{encoder_forward.1} parent=35 // pred_region
        _
      $region52: #{encoder_forward.1} parent=35 // pred_fallthru
        _
      // Predicated region
      $region53: #{encoder_forward.1} parent=35 // pred_check
        %p1540 = pneg %p208
      $region54: #{encoder_forward.1} parent=35 // pred_check_branch
        %1542 = sbr.rel (%p1540) target = $region56
      $region55: #{encoder_forward.1} parent=35 // pred_region
        _
      $region56: #{encoder_forward.1} parent=35 // pred_fallthru
        _
      // Predicated region
      $region57: #{encoder_forward.1} parent=35 // pred_check
        %p1543 = pneg %p152
      $region58: #{encoder_forward.1} parent=35 // pred_check_branch
        %1545 = sbr.rel (%p1543) target = $region60
      $region59: #{encoder_forward.1} parent=35 // pred_region
        %p1546 = scmp.lt.s32.totalorder %s22, 0
        %s1547 = scalar_select %p1546, %s22, 0
        %s1548 = smul.addr %s1547, 8
        %s1549 = scalar_lea.vmem %s4, %s1548
      $region60: #{encoder_forward.1} parent=35 // pred_fallthru
        _
    $region36: #{encoder_forward.1} parent=5 // pred_fallthru
      _
    %p1550 = scmp.le.s32.totalorder 2, %s13
    // Predicated region
    $region61: #{encoder_forward.1} parent=5 // pred_check
      %p1551 = pneg %p1550
    $region62: #{encoder_forward.1} parent=5 // pred_check_branch
      %1553 = sbr.rel (%p1551) target = $region64
    $region63: #{encoder_forward.1} parent=5 // pred_region
      %s1554 = ssub.s32 %s13, 2
      // Predicated region
      $region65: #{encoder_forward.1} parent=63 // pred_check
        %p1555 = pneg %p186
      $region66: #{encoder_forward.1} parent=63 // pred_check_branch
        %1557 = sbr.rel (%p1555) target = $region68
      $region67: #{encoder_forward.1} parent=63 // pred_region
        %p1558 = scmp.lt.s32.totalorder %s25, 1
        %s1559 = scalar_select %p1558, %s25, 1
        %p1560 = scmp.lt.s32.totalorder %s24, 0
        %s1561 = scalar_select %p1560, %s24, 0
        %s1562 = sadd.s32 %s1561, %s1559
        %s1563 = smul.addr %s1562, 8
        %s1564 = scalar_lea.vmem %s5, %s1563
      $region68: #{encoder_forward.1} parent=63 // pred_fallthru
        _
      // Predicated region
      $region69: #{encoder_forward.1} parent=63 // pred_check
        %p1565 = pneg %p214
      $region70: #{encoder_forward.1} parent=63 // pred_check_branch
        %1567 = sbr.rel (%p1565) target = $region72
      $region71: #{encoder_forward.1} parent=63 // pred_region
        %p1568 = scmp.lt.s32.totalorder %s25, 1
        %s1569 = scalar_select %p1568, %s25, 1
        %p1570 = scmp.lt.s32.totalorder %s24, 0
        %s1571 = scalar_select %p1570, %s24, 0
        %s1572 = sadd.s32 %s1571, %s1569
        %s1573 = smul.addr %s1572, 8
        %s1574 = scalar_lea.vmem %s6, %s1573
      $region72: #{encoder_forward.1} parent=63 // pred_fallthru
        _
    $region64: #{encoder_forward.1} parent=5 // pred_fallthru
      _
  $region6: #{encoder_forward.1} parent=0 // loop_footer
    %s17 = sadd.s32 1, %s13
  $region7: #{encoder_forward.1} parent=0 // loop_footer_branch
    %12 = sbr.rel target = $region3
  $region8: #{encoder_forward.1} parent=0 // loop_exit
    _

</llo_original>
